<compile_context>
chip_gen: v7x
topology: tpu7x:2x2x1
jax: 0.10.0
libtpu: 0.0.40
codegen_flags: <defaults>
</compile_context>

<pallas_src>
import math
import functools

import numpy as np
import jax
import jax.numpy as jnp
from jax.experimental import pallas as pl
from jax.experimental.pallas import tpu as pltpu


# ----------------------------------------------------------------------------
# in-kernel math helpers
# ----------------------------------------------------------------------------
def _layer_norm(x, a, b, eps=1e-6):
    """Annotated-Transformer LayerNorm: a*(x-mean)/(std+eps)+b, unbiased std
    (matches torch.Tensor.std default).  Exact division (f32) — the approximate
    reciprocal is reserved for the softmax denominator only."""
    d = x.shape[-1]
    mean = jnp.mean(x, axis=-1, keepdims=True)
    var = jnp.sum((x - mean) ** 2, axis=-1, keepdims=True) * (1.0 / (d - 1))
    return a * (x - mean) / (jnp.sqrt(var) + eps) + b


# ----------------------------------------------------------------------------
# fused encoder kernel: grid = (batch_tiles, layers)
# ----------------------------------------------------------------------------
def _encoder_fused_kernel(
    h0_ref,        # (TB*S, D)  f32   pre_net output (read only at l == 0)
    mask_ref,      # (TB, 1, S) f32
    wqkv_ref,      # (D, 3D)    bf16  [wq | wk | wv]
    wo_ref,        # (D, D)     bf16
    w1_ref,        # (D, Dff)   bf16
    w2_ref,        # (Dff, D)   bf16
    vecs_ref,      # (8, W)     f32   packed small per-layer vectors
    norma_ref,     # (1, D)     f32   final norm scale
    normb_ref,     # (1, D)     f32   final norm bias
    o_ref,         # (TB*S, D)  f32   output (written at l == L-1)
    h_ref,         # (TB*S, D)  f32   VMEM scratch: resident residual stream
    *, num_heads,
):
    l = pl.program_id(1)
    num_layers = pl.num_programs(1)
    bf16 = jnp.bfloat16
    f32 = jnp.float32

    TB, _, S = mask_ref.shape
    D = h_ref.shape[-1]
    Dff = w1_ref.shape[-1]
    nh = num_heads
    dk = D // nh
    scale = 1.0 / math.sqrt(dk)

    # ---- seed the VMEM-resident residual stream with pre_net output at layer 0
    @pl.when(l == 0)
    def _():
        h_ref[...] = h0_ref[...]

    h = h_ref[...]                                          # (TB*S, D) f32

    # packed per-layer vectors (single DMA): slice rows once per layer step
    vecs = vecs_ref[...]
    ln1_a, ln1_b = vecs[0:1, :D], vecs[1:2, :D]
    ln2_a, ln2_b = vecs[2:3, :D], vecs[3:4, :D]
    bqkv = vecs[4:5, :3 * D]
    bo   = vecs[5:6, :D]
    b1   = vecs[6:7, :Dff]
    b2   = vecs[7:8, :D]

    # additive attention-mask bias, built once per layer step
    mask_bias = jnp.where(mask_ref[...] == 0.0, -1e9, 0.0)  # (TB, 1, S)

    # ---- sublayer 1: h + self_attn(LayerNorm(h))   (dropout = identity)
    xn = _layer_norm(h, ln1_a, ln1_b).astype(bf16)          # (TB*S, D)

    # fused full-width QKV projection: M = TB*S, K = D, N = 3D  (one MXU GEMM)
    qkv = (jnp.dot(xn, wqkv_ref[...], preferred_element_type=f32) + bqkv).astype(bf16)

    ctx_rows = []
    for b in range(TB):                                     # static unroll over batch tile
        r0 = b * S
        # head split via static lane slices (copy/XLU work, no narrow GEMMs)
        qh = jnp.stack([qkv[r0:r0 + S, hh * dk:(hh + 1) * dk] for hh in range(nh)])
        kh = jnp.stack([qkv[r0:r0 + S, D + hh * dk:D + (hh + 1) * dk] for hh in range(nh)])
        vh = jnp.stack([qkv[r0:r0 + S, 2 * D + hh * dk:2 * D + (hh + 1) * dk] for hh in range(nh)])

        s = jnp.einsum("hqd,hkd->hqk", qh, kh,
                       preferred_element_type=f32) * scale + mask_bias[b]   # (nh, S, S)
        m = jnp.max(s, axis=-1, keepdims=True)
        e = jnp.exp(s - m)
        p = e * pl.reciprocal(jnp.sum(e, axis=-1, keepdims=True), approx=True)

        ctx = jnp.einsum("hqk,hkd->hqd", p.astype(bf16), vh,
                         preferred_element_type=f32)                        # (nh, S, dk)
        # head-concat back to (S, D) — lane-offset copies, MXU untouched
        ctx_rows.append(jnp.concatenate([ctx[hh] for hh in range(nh)], axis=-1))

    ctx_all = jnp.concatenate(ctx_rows, axis=0)             # (TB*S, D)

    # single full-width output projection: M = TB*S, K = D, N = D
    attn = jnp.dot(ctx_all.astype(bf16), wo_ref[...], preferred_element_type=f32) + bo
    h = h + attn

    # ---- sublayer 2: h + FFN(LayerNorm(h))
    xn2 = _layer_norm(h, ln2_a, ln2_b).astype(bf16)
    hid = jnp.maximum(jnp.dot(xn2, w1_ref[...], preferred_element_type=f32) + b1, 0.0)
    ff = jnp.dot(hid.astype(bf16), w2_ref[...], preferred_element_type=f32) + b2
    h = h + ff

    h_ref[...] = h                                          # keep residual stream in VMEM

    # ---- final LayerNorm folded into the last layer step
    @pl.when(l == num_layers - 1)
    def _():
        o_ref[...] = _layer_norm(h, norma_ref[...], normb_ref[...])


# ----------------------------------------------------------------------------
# wrapper: pre_net in XLA, host-side weight re-layout, single pallas_call
# ----------------------------------------------------------------------------
def encoder_forward(x, mask, params, num_heads, batch_tile=None):
    B, S, Din = x.shape
    L, D, _ = params["wq"].shape
    Dff = params["w1"].shape[2]
    f32 = jnp.float32

    # batch tile: amortizes per-layer weight DMA over TB batch elements.
    # NOTE(v7x): keep B // TB >= 2 where possible so both TensorCores get work.
    if batch_tile is None:
        batch_tile = next(t for t in (8, 4, 2, 1) if B % t == 0)
    TB = batch_tile
    assert B % TB == 0, "batch must be divisible by the batch tile"

    # pre_net as a plain XLA matmul (overlaps with the first weight prefetch);
    # only its output h0 enters the fused kernel.
    h0 = (x @ params["pre_w"].astype(f32) + params["pre_b"]).reshape(B * S, D)

    # --- host-side one-time weight re-layout ---------------------------------
    # fused QKV weight: (L, D, 3D) = [wq | wk | wv] along output columns
    wqkv = jnp.concatenate([params["wq"], params["wk"], params["wv"]], axis=-1)

    # pack all tiny per-layer vectors into a single (L, 8, W) f32 tensor
    W = max(3 * D, Dff)

    def row(v):
        v = v.reshape(L, -1)
        return jnp.pad(v, ((0, 0), (0, W - v.shape[-1])))

    vecs = jnp.stack([
        row(params["ln1_a"]), row(params["ln1_b"]),
        row(params["ln2_a"]), row(params["ln2_b"]),
        row(jnp.concatenate([params["bq"], params["bk"], params["bv"]], axis=-1)),
        row(params["bo"]), row(params["b1"]), row(params["b2"]),
    ], axis=1).astype(f32)                                   # (L, 8, W)

    kern = functools.partial(_encoder_fused_kernel, num_heads=num_heads)

    def per_layer(shape):
        # stacked per-layer tensor: leading layer dim selected by grid axis 1 (squeezed)
        return pl.BlockSpec((None,) + shape, lambda b, l: (l,) + (0,) * len(shape))

    in_specs = [
        pl.BlockSpec((TB * S, D), lambda b, l: (b, 0)),       # h0 (seed, layer-invariant)
        pl.BlockSpec((TB, 1, S), lambda b, l: (b, 0, 0)),     # mask
        per_layer((D, 3 * D)),                                # wqkv
        per_layer((D, D)),                                    # wo
        per_layer((D, Dff)),                                  # w1
        per_layer((Dff, D)),                                  # w2
        per_layer((8, W)),                                    # packed small vectors
        pl.BlockSpec((1, D), lambda b, l: (0, 0)),            # final norm a (shared)
        pl.BlockSpec((1, D), lambda b, l: (0, 0)),            # final norm b (shared)
    ]
    out_spec = pl.BlockSpec((TB * S, D), lambda b, l: (b, 0))  # resident across layers

    # explicit VMEM budget: double-buffered bf16 weights + activations, with margin.
    # Capped at 64 MiB so the same setting is valid on v7x; v5e/v6e (128 MiB) may raise it.
    wbytes = 2 * 2 * (D * 3 * D + D * D + 2 * D * Dff)
    abytes = 4 * (TB * S * (6 * D + Dff) + TB * num_heads * S * S)
    vmem_limit = int(min(max(2 * (wbytes + abytes), 32 * 1024 * 1024), 64 * 1024 * 1024))

    out = pl.pallas_call(
        kern,
        out_shape=jax.ShapeDtypeStruct((B * S, D), f32),
        grid=(B // TB, L),
        in_specs=in_specs,
        out_specs=out_spec,
        scratch_shapes=[pltpu.VMEM((TB * S, D), f32)],
        compiler_params=pltpu.CompilerParams(
            dimension_semantics=("parallel", "arbitrary"),
            vmem_limit_bytes=vmem_limit),
    )(h0, mask, wqkv, params["wo"], params["w1"], params["w2"], vecs,
      params["norm_a"], params["norm_b"])

    return out.reshape(B, S, D)


# ----------------------------------------------------------------------------
# deterministic parameter init (PyTorch nn.Linear-style uniform init)
# weight matrices stored in bf16 (MXU-native, halves DMA bytes); biases / LN in f32.
# ----------------------------------------------------------------------------
def init_params(key, d_in, d_model, d_ff, num_layers):
    def lin(k, i, o):
        kw, kb = jax.random.split(k)
        s = 1.0 / math.sqrt(i)
        w = jax.random.uniform(kw, (i, o), jnp.float32, -s, s)
        b = jax.random.uniform(kb, (1, o), jnp.float32, -s, s)
        return w, b

    keys = jax.random.split(key, 1 + num_layers)
    pre_w, pre_b = lin(keys[0], d_in, d_model)

    names = ["q", "k", "v", "o", "1", "2"]
    sizes = {"q": (d_model, d_model), "k": (d_model, d_model),
             "v": (d_model, d_model), "o": (d_model, d_model),
             "1": (d_model, d_ff), "2": (d_ff, d_model)}
    ws = {n: [] for n in names}
    bs = {n: [] for n in names}
    for n in range(num_layers):
        ks = jax.random.split(keys[1 + n], len(names))
        for name, kk in zip(names, ks):
            i, o = sizes[name]
            w, b = lin(kk, i, o)
            ws[name].append(w)
            bs[name].append(b)

    params = dict(
        pre_w=pre_w.astype(jnp.bfloat16), pre_b=pre_b,
        ln1_a=jnp.ones((num_layers, 1, d_model), jnp.float32),
        ln1_b=jnp.zeros((num_layers, 1, d_model), jnp.float32),
        ln2_a=jnp.ones((num_layers, 1, d_model), jnp.float32),
        ln2_b=jnp.zeros((num_layers, 1, d_model), jnp.float32),
        norm_a=jnp.ones((1, d_model), jnp.float32),
        norm_b=jnp.zeros((1, d_model), jnp.float32),
    )
    for name in names:
        params["w" + name] = jnp.stack(ws[name]).astype(jnp.bfloat16)  # (L, i, o) bf16
        params["b" + name] = jnp.stack(bs[name])                       # (L, 1, o) f32
    return params


# ----------------------------------------------------------------------------
# pure-JAX f32 reference (same bf16-valued weights) for a correctness check
# ----------------------------------------------------------------------------
def reference_forward(x, mask, params, num_heads):
    def ln(x, a, b, eps=1e-6):
        d = x.shape[-1]
        m = jnp.mean(x, -1, keepdims=True)
        std = jnp.sqrt(jnp.sum((x - m) ** 2, -1, keepdims=True) / (d - 1))
        return a * (x - m) / (std + eps) + b

    f32 = lambda t: t.astype(jnp.float32)
    h = x @ f32(params["pre_w"]) + params["pre_b"]
    L = params["wq"].shape[0]
    for n in range(L):
        D = h.shape[-1]
        dk = D // num_heads
        xn = ln(h, params["ln1_a"][n], params["ln1_b"][n])
        q = xn @ f32(params["wq"][n]) + params["bq"][n]
        k = xn @ f32(params["wk"][n]) + params["bk"][n]
        v = xn @ f32(params["wv"][n]) + params["bv"][n]
        B, S, _ = q.shape
        qh = q.reshape(B, S, num_heads, dk).transpose(0, 2, 1, 3)
        kh = k.reshape(B, S, num_heads, dk).transpose(0, 2, 1, 3)
        vh = v.reshape(B, S, num_heads, dk).transpose(0, 2, 1, 3)
        sc = jnp.einsum("bhqd,bhkd->bhqk", qh, kh) / math.sqrt(dk)
        sc = jnp.where(mask[:, None, :, :] == 0.0, -1e9, sc)
        pr = jax.nn.softmax(sc, axis=-1)
        ctx = jnp.einsum("bhqk,bhkd->bhqd", pr, vh).transpose(0, 2, 1, 3).reshape(B, S, D)
        h = h + (ctx @ f32(params["wo"][n]) + params["bo"][n])
        xn2 = ln(h, params["ln2_a"][n], params["ln2_b"][n])
        h = h + (jnp.maximum(xn2 @ f32(params["w1"][n]) + params["b1"][n], 0.0)
                 @ f32(params["w2"][n]) + params["b2"][n])
    return ln(h, params["norm_a"], params["norm_b"])


if __name__ == "__main__":
    B, S, D_IN, D_MODEL, D_FF, N_LAYERS, N_HEADS = 2, 8, 16, 32, 64, 2, 4

    key = jax.random.PRNGKey(0)
    kx, kp = jax.random.split(key)
    x = jax.random.normal(kx, (B, S, D_IN), jnp.float32)

    # mask: (B, 1, S), 1.0 = attend, 0.0 = padded key (batch 1 has 2 padded positions)
    mask = jnp.ones((B, 1, S), jnp.float32)
    mask = mask.at[1, 0, S - 2:].set(0.0)

    params = init_params(kp, D_IN, D_MODEL, D_FF, N_LAYERS)

    out = encoder_forward(x, mask, params, N_HEADS)
    out = jax.block_until_ready(out)

    ref = reference_forward(x, mask, params, N_HEADS)
    # bf16 MXU inputs + EUP approx reciprocal in the softmax -> compare against
    # the f32 reference with a correspondingly looser tolerance.
    np.testing.assert_allclose(np.asarray(out), np.asarray(ref), rtol=5e-2, atol=5e-2)

    print("KERNEL_OK")
</pallas_src>

<mosaic_0001>
module attributes {stable_mosaic.version = 11 : i64} {
  func.func @_encoder_fused_kernel(%arg0: i32, %arg1: i32, %arg2: memref<16x32xf32, #tpu.memory_space<vmem>>, %arg3: memref<2x1x8xf32, #tpu.memory_space<vmem>>, %arg4: memref<1x32x96xbf16, #tpu.memory_space<vmem>>, %arg5: memref<1x32x32xbf16, #tpu.memory_space<vmem>>, %arg6: memref<1x32x64xbf16, #tpu.memory_space<vmem>>, %arg7: memref<1x64x32xbf16, #tpu.memory_space<vmem>>, %arg8: memref<1x8x96xf32, #tpu.memory_space<vmem>>, %arg9: memref<1x32xf32, #tpu.memory_space<vmem>>, %arg10: memref<1x32xf32, #tpu.memory_space<vmem>>, %arg11: memref<16x32xf32, #tpu.memory_space<vmem>>, %arg12: memref<16x32xf32, #tpu.memory_space<vmem>>) attributes {dimension_semantics = [#tpu.dimension_semantics<parallel>, #tpu.dimension_semantics<arbitrary>], iteration_bounds = array<i64: 1, 2>, scalar_prefetch = 0 : i64, scratch_operands = 1 : i64, tpu.core_type = #tpu.core_type<tc>, window_params = [{transform_indices = @transform_0, window_bounds = array<i64: 16, 32>}, {transform_indices = @transform_1, window_bounds = array<i64: 2, 1, 8>}, {transform_indices = @transform_2, window_bounds = array<i64: 1, 32, 96>}, {transform_indices = @transform_3, window_bounds = array<i64: 1, 32, 32>}, {transform_indices = @transform_4, window_bounds = array<i64: 1, 32, 64>}, {transform_indices = @transform_5, window_bounds = array<i64: 1, 64, 32>}, {transform_indices = @transform_6, window_bounds = array<i64: 1, 8, 96>}, {pipeline_mode = #tpu.pipeline_mode<synchronous>, transform_indices = @transform_7, window_bounds = array<i64: 1, 32>}, {pipeline_mode = #tpu.pipeline_mode<synchronous>, transform_indices = @transform_8, window_bounds = array<i64: 1, 32>}, {transform_indices = @transform_9, window_bounds = array<i64: 16, 32>}]} {
    %c0_i32 = arith.constant 0 : i32
    %0 = arith.cmpi eq, %arg1, %c0_i32 : i32
    %1 = arith.extui %0 : i1 to i32
    %c0_i32_0 = arith.constant 0 : i32
    %2 = arith.cmpi ne, %1, %c0_i32_0 : i32
    scf.if %2 {
      %c0_50 = arith.constant 0 : index
      %c0_51 = arith.constant 0 : index
      %210 = vector.load %arg2[%c0_50, %c0_51] : memref<16x32xf32, #tpu.memory_space<vmem>>, vector<16x32xf32>
      %c0_52 = arith.constant 0 : index
      %c0_53 = arith.constant 0 : index
      %211 = vector.load %arg12[%c0_52, %c0_53] : memref<16x32xf32, #tpu.memory_space<vmem>>, vector<16x32xf32>
      tpu.vector_store %arg12[%c0_52, %c0_53], %210 {strides = array<i32>} : memref<16x32xf32, #tpu.memory_space<vmem>>, vector<16x32xf32>,
    } else {
    }
    %c0 = arith.constant 0 : index
    %c0_1 = arith.constant 0 : index
    %3 = vector.load %arg12[%c0, %c0_1] : memref<16x32xf32, #tpu.memory_space<vmem>>, vector<16x32xf32>
    %c0_2 = arith.constant 0 : index
    %c0_3 = arith.constant 0 : index
    %c0_4 = arith.constant 0 : index
    %4 = vector.load %arg8[%c0_2, %c0_3, %c0_4] : memref<1x8x96xf32, #tpu.memory_space<vmem>>, vector<1x8x96xf32>
    %5 = vector.shape_cast %4 : vector<1x8x96xf32> to vector<8x96xf32>
    %6 = vector.extract_strided_slice %5 {offsets = [0, 0], sizes = [1, 32], strides = [1, 1]} : vector<8x96xf32> to vector<1x32xf32>
    %7 = vector.extract_strided_slice %5 {offsets = [1, 0], sizes = [1, 32], strides = [1, 1]} : vector<8x96xf32> to vector<1x32xf32>
    %8 = vector.extract_strided_slice %5 {offsets = [2, 0], sizes = [1, 32], strides = [1, 1]} : vector<8x96xf32> to vector<1x32xf32>
    %9 = vector.extract_strided_slice %5 {offsets = [3, 0], sizes = [1, 32], strides = [1, 1]} : vector<8x96xf32> to vector<1x32xf32>
    %10 = vector.extract_strided_slice %5 {offsets = [4, 0], sizes = [1, 96], strides = [1, 1]} : vector<8x96xf32> to vector<1x96xf32>
    %11 = vector.extract_strided_slice %5 {offsets = [5, 0], sizes = [1, 32], strides = [1, 1]} : vector<8x96xf32> to vector<1x32xf32>
    %12 = vector.extract_strided_slice %5 {offsets = [6, 0], sizes = [1, 64], strides = [1, 1]} : vector<8x96xf32> to vector<1x64xf32>
    %13 = vector.extract_strided_slice %5 {offsets = [7, 0], sizes = [1, 32], strides = [1, 1]} : vector<8x96xf32> to vector<1x32xf32>
    %c0_5 = arith.constant 0 : index
    %c0_6 = arith.constant 0 : index
    %c0_7 = arith.constant 0 : index
    %14 = vector.load %arg3[%c0_5, %c0_6, %c0_7] : memref<2x1x8xf32, #tpu.memory_space<vmem>>, vector<2x1x8xf32>
    %cst = arith.constant 0.000000e+00 : f32
    %15 = vector.broadcast %cst : f32 to vector<2x1x8xf32>
    %16 = arith.cmpf oeq, %14, %15 : vector<2x1x8xf32>
    %cst_8 = arith.constant -1.000000e+09 : f32
    %cst_9 = arith.constant 0.000000e+00 : f32
    %17 = vector.broadcast %cst_8 : f32 to vector<2x1x8xf32>
    %18 = vector.broadcast %cst_9 : f32 to vector<2x1x8xf32>
    %19 = arith.select %16, %17, %18 : vector<2x1x8xi1>, vector<2x1x8xf32>
    %cst_10 = arith.constant dense<0.000000e+00> : vector<16xf32>
    %20 = vector.multi_reduction <add>, %3, %cst_10 [1] : vector<16x32xf32> to vector<16xf32>
    %21 = vector.shape_cast %20 : vector<16xf32> to vector<16x1xf32>
    %cst_11 = arith.constant 3.200000e+01 : f32
    %22 = vector.broadcast %cst_11 : f32 to vector<16x1xf32>
    %23 = arith.divf %21, %22 : vector<16x1xf32>
    %24 = vector.broadcast %23 : vector<16x1xf32> to vector<16x32xf32>
    %25 = arith.subf %3, %24 : vector<16x32xf32>
    %26 = arith.mulf %25, %25 : vector<16x32xf32>
    %cst_12 = arith.constant dense<0.000000e+00> : vector<16xf32>
    %27 = vector.multi_reduction <add>, %26, %cst_12 [1] : vector<16x32xf32> to vector<16xf32>
    %28 = vector.shape_cast %27 : vector<16xf32> to vector<16x1xf32>
    %cst_13 = arith.constant 0.0322580636 : f32
    %29 = vector.broadcast %cst_13 : f32 to vector<16x1xf32>
    %30 = arith.mulf %28, %29 : vector<16x1xf32>
    %31 = vector.broadcast %23 : vector<16x1xf32> to vector<16x32xf32>
    %32 = arith.subf %3, %31 : vector<16x32xf32>
    %33 = vector.broadcast %6 : vector<1x32xf32> to vector<16x32xf32>
    %34 = arith.mulf %33, %32 : vector<16x32xf32>
    %35 = math.sqrt %30 : vector<16x1xf32>
    %cst_14 = arith.constant 9.99999997E-7 : f32
    %36 = vector.broadcast %cst_14 : f32 to vector<16x1xf32>
    %37 = arith.addf %35, %36 : vector<16x1xf32>
    %38 = vector.broadcast %37 : vector<16x1xf32> to vector<16x32xf32>
    %39 = arith.divf %34, %38 : vector<16x32xf32>
    %40 = vector.broadcast %7 : vector<1x32xf32> to vector<16x32xf32>
    %41 = arith.addf %39, %40 : vector<16x32xf32>
    %42 = arith.truncf %41 : vector<16x32xf32> to vector<16x32xbf16>
    %c0_15 = arith.constant 0 : index
    %c0_16 = arith.constant 0 : index
    %c0_17 = arith.constant 0 : index
    %43 = vector.load %arg4[%c0_15, %c0_16, %c0_17] : memref<1x32x96xbf16, #tpu.memory_space<vmem>>, vector<1x32x96xbf16>
    %44 = vector.shape_cast %43 : vector<1x32x96xbf16> to vector<32x96xbf16>
    %cst_18 = arith.constant dense<0.000000e+00> : vector<16x96xf32>
    %45 = tpu.matmul %42, %44, %cst_18 {dimension_numbers = #tpu.dot_dimension_numbers<[1], [0], [0], [1], [0, 0, 1, 1], [], []>} : vector<16x32xbf16>, vector<32x96xbf16>, vector<16x96xf32> -> vector<16x96xf32>
    %46 = vector.broadcast %10 : vector<1x96xf32> to vector<16x96xf32>
    %47 = arith.addf %45, %46 : vector<16x96xf32>
    %48 = arith.truncf %47 : vector<16x96xf32> to vector<16x96xbf16>
    %49 = vector.extract_strided_slice %48 {offsets = [0, 0], sizes = [8, 8], strides = [1, 1]} : vector<16x96xbf16> to vector<8x8xbf16>
    %50 = vector.extract_strided_slice %48 {offsets = [0, 8], sizes = [8, 8], strides = [1, 1]} : vector<16x96xbf16> to vector<8x8xbf16>
    %51 = vector.extract_strided_slice %48 {offsets = [0, 16], sizes = [8, 8], strides = [1, 1]} : vector<16x96xbf16> to vector<8x8xbf16>
    %52 = vector.extract_strided_slice %48 {offsets = [0, 24], sizes = [8, 8], strides = [1, 1]} : vector<16x96xbf16> to vector<8x8xbf16>
    %53 = vector.shape_cast %49 : vector<8x8xbf16> to vector<1x8x8xbf16>
    %54 = vector.shape_cast %50 : vector<8x8xbf16> to vector<1x8x8xbf16>
    %55 = vector.shape_cast %51 : vector<8x8xbf16> to vector<1x8x8xbf16>
    %56 = vector.shape_cast %52 : vector<8x8xbf16> to vector<1x8x8xbf16>
    %57 = tpu.concatenate %53, %54, %55, %56 in 0 : vector<1x8x8xbf16>, vector<1x8x8xbf16>, vector<1x8x8xbf16>, vector<1x8x8xbf16> -> vector<4x8x8xbf16>
    %58 = vector.extract_strided_slice %48 {offsets = [0, 32], sizes = [8, 8], strides = [1, 1]} : vector<16x96xbf16> to vector<8x8xbf16>
    %59 = vector.extract_strided_slice %48 {offsets = [0, 40], sizes = [8, 8], strides = [1, 1]} : vector<16x96xbf16> to vector<8x8xbf16>
    %60 = vector.extract_strided_slice %48 {offsets = [0, 48], sizes = [8, 8], strides = [1, 1]} : vector<16x96xbf16> to vector<8x8xbf16>
    %61 = vector.extract_strided_slice %48 {offsets = [0, 56], sizes = [8, 8], strides = [1, 1]} : vector<16x96xbf16> to vector<8x8xbf16>
    %62 = vector.shape_cast %58 : vector<8x8xbf16> to vector<1x8x8xbf16>
    %63 = vector.shape_cast %59 : vector<8x8xbf16> to vector<1x8x8xbf16>
    %64 = vector.shape_cast %60 : vector<8x8xbf16> to vector<1x8x8xbf16>
    %65 = vector.shape_cast %61 : vector<8x8xbf16> to vector<1x8x8xbf16>
    %66 = tpu.concatenate %62, %63, %64, %65 in 0 : vector<1x8x8xbf16>, vector<1x8x8xbf16>, vector<1x8x8xbf16>, vector<1x8x8xbf16> -> vector<4x8x8xbf16>
    %67 = vector.extract_strided_slice %48 {offsets = [0, 64], sizes = [8, 8], strides = [1, 1]} : vector<16x96xbf16> to vector<8x8xbf16>
    %68 = vector.extract_strided_slice %48 {offsets = [0, 72], sizes = [8, 8], strides = [1, 1]} : vector<16x96xbf16> to vector<8x8xbf16>
    %69 = vector.extract_strided_slice %48 {offsets = [0, 80], sizes = [8, 8], strides = [1, 1]} : vector<16x96xbf16> to vector<8x8xbf16>
    %70 = vector.extract_strided_slice %48 {offsets = [0, 88], sizes = [8, 8], strides = [1, 1]} : vector<16x96xbf16> to vector<8x8xbf16>
    %71 = vector.shape_cast %67 : vector<8x8xbf16> to vector<1x8x8xbf16>
    %72 = vector.shape_cast %68 : vector<8x8xbf16> to vector<1x8x8xbf16>
    %73 = vector.shape_cast %69 : vector<8x8xbf16> to vector<1x8x8xbf16>
    %74 = vector.shape_cast %70 : vector<8x8xbf16> to vector<1x8x8xbf16>
    %75 = tpu.concatenate %71, %72, %73, %74 in 0 : vector<1x8x8xbf16>, vector<1x8x8xbf16>, vector<1x8x8xbf16>, vector<1x8x8xbf16> -> vector<4x8x8xbf16>
    "tpu.trace_start"() <{level = 10 : i32, message = "hqd,hkd->hqk"}> : () -> ()
    %cst_19 = arith.constant dense<0.000000e+00> : vector<4x8x8xf32>
    %76 = tpu.matmul %57, %66, %cst_19 {dimension_numbers = #tpu.dot_dimension_numbers<[2], [2], [1], [1], [0, 0, 0, 1, 1, 1], [0], [0]>} : vector<4x8x8xbf16>, vector<4x8x8xbf16>, vector<4x8x8xf32> -> vector<4x8x8xf32>
    "tpu.trace_stop"() : () -> ()
    %cst_20 = arith.constant 0.353553385 : f32
    %77 = vector.broadcast %cst_20 : f32 to vector<4x8x8xf32>
    %78 = arith.mulf %76, %77 : vector<4x8x8xf32>
    %79 = vector.extract_strided_slice %19 {offsets = [0, 0, 0], sizes = [1, 1, 8], strides = [1, 1, 1]} : vector<2x1x8xf32> to vector<1x1x8xf32>
    %80 = vector.shape_cast %79 : vector<1x1x8xf32> to vector<1x8xf32>
    %81 = vector.shape_cast %80 : vector<1x8xf32> to vector<1x1x8xf32>
    %82 = vector.broadcast %81 : vector<1x1x8xf32> to vector<4x8x8xf32>
    %83 = arith.addf %78, %82 : vector<4x8x8xf32>
    %cst_21 = arith.constant dense<0xFF800000> : vector<4x8xf32>
    %84 = vector.multi_reduction <maximumf>, %83, %cst_21 [2] : vector<4x8x8xf32> to vector<4x8xf32>
    %85 = vector.shape_cast %84 : vector<4x8xf32> to vector<4x8x1xf32>
    %86 = vector.broadcast %85 : vector<4x8x1xf32> to vector<4x8x8xf32>
    %87 = arith.subf %83, %86 : vector<4x8x8xf32>
    %88 = math.exp %87 : vector<4x8x8xf32>
    %cst_22 = arith.constant dense<0.000000e+00> : vector<4x8xf32>
    %89 = vector.multi_reduction <add>, %88, %cst_22 [2] : vector<4x8x8xf32> to vector<4x8xf32>
    %90 = vector.shape_cast %89 : vector<4x8xf32> to vector<4x8x1xf32>
    %91 = tpu.reciprocal %90 {approx = true} : vector<4x8x1xf32> -> vector<4x8x1xf32>
    %92 = vector.broadcast %91 : vector<4x8x1xf32> to vector<4x8x8xf32>
    %93 = arith.mulf %88, %92 : vector<4x8x8xf32>
    %94 = arith.truncf %93 : vector<4x8x8xf32> to vector<4x8x8xbf16>
    "tpu.trace_start"() <{level = 10 : i32, message = "hqk,hkd->hqd"}> : () -> ()
    %cst_23 = arith.constant dense<0.000000e+00> : vector<4x8x8xf32>
    %95 = tpu.matmul %94, %75, %cst_23 {dimension_numbers = #tpu.dot_dimension_numbers<[2], [1], [1], [2], [0, 0, 0, 1, 1, 2], [0], [0]>} : vector<4x8x8xbf16>, vector<4x8x8xbf16>, vector<4x8x8xf32> -> vector<4x8x8xf32>
    "tpu.trace_stop"() : () -> ()
    %96 = vector.extract_strided_slice %95 {offsets = [0, 0, 0], sizes = [1, 8, 8], strides = [1, 1, 1]} : vector<4x8x8xf32> to vector<1x8x8xf32>
    %97 = vector.shape_cast %96 : vector<1x8x8xf32> to vector<8x8xf32>
    %98 = vector.extract_strided_slice %95 {offsets = [1, 0, 0], sizes = [1, 8, 8], strides = [1, 1, 1]} : vector<4x8x8xf32> to vector<1x8x8xf32>
    %99 = vector.shape_cast %98 : vector<1x8x8xf32> to vector<8x8xf32>
    %100 = vector.extract_strided_slice %95 {offsets = [2, 0, 0], sizes = [1, 8, 8], strides = [1, 1, 1]} : vector<4x8x8xf32> to vector<1x8x8xf32>
    %101 = vector.shape_cast %100 : vector<1x8x8xf32> to vector<8x8xf32>
    %102 = vector.extract_strided_slice %95 {offsets = [3, 0, 0], sizes = [1, 8, 8], strides = [1, 1, 1]} : vector<4x8x8xf32> to vector<1x8x8xf32>
    %103 = vector.shape_cast %102 : vector<1x8x8xf32> to vector<8x8xf32>
    %104 = tpu.concatenate %97, %99, %101, %103 in 1 : vector<8x8xf32>, vector<8x8xf32>, vector<8x8xf32>, vector<8x8xf32> -> vector<8x32xf32>
    %105 = vector.extract_strided_slice %48 {offsets = [8, 0], sizes = [8, 8], strides = [1, 1]} : vector<16x96xbf16> to vector<8x8xbf16>
    %106 = vector.extract_strided_slice %48 {offsets = [8, 8], sizes = [8, 8], strides = [1, 1]} : vector<16x96xbf16> to vector<8x8xbf16>
    %107 = vector.extract_strided_slice %48 {offsets = [8, 16], sizes = [8, 8], strides = [1, 1]} : vector<16x96xbf16> to vector<8x8xbf16>
    %108 = vector.extract_strided_slice %48 {offsets = [8, 24], sizes = [8, 8], strides = [1, 1]} : vector<16x96xbf16> to vector<8x8xbf16>
    %109 = vector.shape_cast %105 : vector<8x8xbf16> to vector<1x8x8xbf16>
    %110 = vector.shape_cast %106 : vector<8x8xbf16> to vector<1x8x8xbf16>
    %111 = vector.shape_cast %107 : vector<8x8xbf16> to vector<1x8x8xbf16>
    %112 = vector.shape_cast %108 : vector<8x8xbf16> to vector<1x8x8xbf16>
    %113 = tpu.concatenate %109, %110, %111, %112 in 0 : vector<1x8x8xbf16>, vector<1x8x8xbf16>, vector<1x8x8xbf16>, vector<1x8x8xbf16> -> vector<4x8x8xbf16>
    %114 = vector.extract_strided_slice %48 {offsets = [8, 32], sizes = [8, 8], strides = [1, 1]} : vector<16x96xbf16> to vector<8x8xbf16>
    %115 = vector.extract_strided_slice %48 {offsets = [8, 40], sizes = [8, 8], strides = [1, 1]} : vector<16x96xbf16> to vector<8x8xbf16>
    %116 = vector.extract_strided_slice %48 {offsets = [8, 48], sizes = [8, 8], strides = [1, 1]} : vector<16x96xbf16> to vector<8x8xbf16>
    %117 = vector.extract_strided_slice %48 {offsets = [8, 56], sizes = [8, 8], strides = [1, 1]} : vector<16x96xbf16> to vector<8x8xbf16>
    %118 = vector.shape_cast %114 : vector<8x8xbf16> to vector<1x8x8xbf16>
    %119 = vector.shape_cast %115 : vector<8x8xbf16> to vector<1x8x8xbf16>
    %120 = vector.shape_cast %116 : vector<8x8xbf16> to vector<1x8x8xbf16>
    %121 = vector.shape_cast %117 : vector<8x8xbf16> to vector<1x8x8xbf16>
    %122 = tpu.concatenate %118, %119, %120, %121 in 0 : vector<1x8x8xbf16>, vector<1x8x8xbf16>, vector<1x8x8xbf16>, vector<1x8x8xbf16> -> vector<4x8x8xbf16>
    %123 = vector.extract_strided_slice %48 {offsets = [8, 64], sizes = [8, 8], strides = [1, 1]} : vector<16x96xbf16> to vector<8x8xbf16>
    %124 = vector.extract_strided_slice %48 {offsets = [8, 72], sizes = [8, 8], strides = [1, 1]} : vector<16x96xbf16> to vector<8x8xbf16>
    %125 = vector.extract_strided_slice %48 {offsets = [8, 80], sizes = [8, 8], strides = [1, 1]} : vector<16x96xbf16> to vector<8x8xbf16>
    %126 = vector.extract_strided_slice %48 {offsets = [8, 88], sizes = [8, 8], strides = [1, 1]} : vector<16x96xbf16> to vector<8x8xbf16>
    %127 = vector.shape_cast %123 : vector<8x8xbf16> to vector<1x8x8xbf16>
    %128 = vector.shape_cast %124 : vector<8x8xbf16> to vector<1x8x8xbf16>
    %129 = vector.shape_cast %125 : vector<8x8xbf16> to vector<1x8x8xbf16>
    %130 = vector.shape_cast %126 : vector<8x8xbf16> to vector<1x8x8xbf16>
    %131 = tpu.concatenate %127, %128, %129, %130 in 0 : vector<1x8x8xbf16>, vector<1x8x8xbf16>, vector<1x8x8xbf16>, vector<1x8x8xbf16> -> vector<4x8x8xbf16>
    "tpu.trace_start"() <{level = 10 : i32, message = "hqd,hkd->hqk"}> : () -> ()
    %cst_24 = arith.constant dense<0.000000e+00> : vector<4x8x8xf32>
    %132 = tpu.matmul %113, %122, %cst_24 {dimension_numbers = #tpu.dot_dimension_numbers<[2], [2], [1], [1], [0, 0, 0, 1, 1, 1], [0], [0]>} : vector<4x8x8xbf16>, vector<4x8x8xbf16>, vector<4x8x8xf32> -> vector<4x8x8xf32>
    "tpu.trace_stop"() : () -> ()
    %cst_25 = arith.constant 0.353553385 : f32
    %133 = vector.broadcast %cst_25 : f32 to vector<4x8x8xf32>
    %134 = arith.mulf %132, %133 : vector<4x8x8xf32>
    %135 = vector.extract_strided_slice %19 {offsets = [1, 0, 0], sizes = [1, 1, 8], strides = [1, 1, 1]} : vector<2x1x8xf32> to vector<1x1x8xf32>
    %136 = vector.shape_cast %135 : vector<1x1x8xf32> to vector<1x8xf32>
    %137 = vector.shape_cast %136 : vector<1x8xf32> to vector<1x1x8xf32>
    %138 = vector.broadcast %137 : vector<1x1x8xf32> to vector<4x8x8xf32>
    %139 = arith.addf %134, %138 : vector<4x8x8xf32>
    %cst_26 = arith.constant dense<0xFF800000> : vector<4x8xf32>
    %140 = vector.multi_reduction <maximumf>, %139, %cst_26 [2] : vector<4x8x8xf32> to vector<4x8xf32>
    %141 = vector.shape_cast %140 : vector<4x8xf32> to vector<4x8x1xf32>
    %142 = vector.broadcast %141 : vector<4x8x1xf32> to vector<4x8x8xf32>
    %143 = arith.subf %139, %142 : vector<4x8x8xf32>
    %144 = math.exp %143 : vector<4x8x8xf32>
    %cst_27 = arith.constant dense<0.000000e+00> : vector<4x8xf32>
    %145 = vector.multi_reduction <add>, %144, %cst_27 [2] : vector<4x8x8xf32> to vector<4x8xf32>
    %146 = vector.shape_cast %145 : vector<4x8xf32> to vector<4x8x1xf32>
    %147 = tpu.reciprocal %146 {approx = true} : vector<4x8x1xf32> -> vector<4x8x1xf32>
    %148 = vector.broadcast %147 : vector<4x8x1xf32> to vector<4x8x8xf32>
    %149 = arith.mulf %144, %148 : vector<4x8x8xf32>
    %150 = arith.truncf %149 : vector<4x8x8xf32> to vector<4x8x8xbf16>
    "tpu.trace_start"() <{level = 10 : i32, message = "hqk,hkd->hqd"}> : () -> ()
    %cst_28 = arith.constant dense<0.000000e+00> : vector<4x8x8xf32>
    %151 = tpu.matmul %150, %131, %cst_28 {dimension_numbers = #tpu.dot_dimension_numbers<[2], [1], [1], [2], [0, 0, 0, 1, 1, 2], [0], [0]>} : vector<4x8x8xbf16>, vector<4x8x8xbf16>, vector<4x8x8xf32> -> vector<4x8x8xf32>
    "tpu.trace_stop"() : () -> ()
    %152 = vector.extract_strided_slice %151 {offsets = [0, 0, 0], sizes = [1, 8, 8], strides = [1, 1, 1]} : vector<4x8x8xf32> to vector<1x8x8xf32>
    %153 = vector.shape_cast %152 : vector<1x8x8xf32> to vector<8x8xf32>
    %154 = vector.extract_strided_slice %151 {offsets = [1, 0, 0], sizes = [1, 8, 8], strides = [1, 1, 1]} : vector<4x8x8xf32> to vector<1x8x8xf32>
    %155 = vector.shape_cast %154 : vector<1x8x8xf32> to vector<8x8xf32>
    %156 = vector.extract_strided_slice %151 {offsets = [2, 0, 0], sizes = [1, 8, 8], strides = [1, 1, 1]} : vector<4x8x8xf32> to vector<1x8x8xf32>
    %157 = vector.shape_cast %156 : vector<1x8x8xf32> to vector<8x8xf32>
    %158 = vector.extract_strided_slice %151 {offsets = [3, 0, 0], sizes = [1, 8, 8], strides = [1, 1, 1]} : vector<4x8x8xf32> to vector<1x8x8xf32>
    %159 = vector.shape_cast %158 : vector<1x8x8xf32> to vector<8x8xf32>
    %160 = tpu.concatenate %153, %155, %157, %159 in 1 : vector<8x8xf32>, vector<8x8xf32>, vector<8x8xf32>, vector<8x8xf32> -> vector<8x32xf32>
    %161 = tpu.concatenate %104, %160 in 0 : vector<8x32xf32>, vector<8x32xf32> -> vector<16x32xf32>
    %162 = arith.truncf %161 : vector<16x32xf32> to vector<16x32xbf16>
    %c0_29 = arith.constant 0 : index
    %c0_30 = arith.constant 0 : index
    %c0_31 = arith.constant 0 : index
    %163 = vector.load %arg5[%c0_29, %c0_30, %c0_31] : memref<1x32x32xbf16, #tpu.memory_space<vmem>>, vector<1x32x32xbf16>
    %164 = vector.shape_cast %163 : vector<1x32x32xbf16> to vector<32x32xbf16>
    %cst_32 = arith.constant dense<0.000000e+00> : vector<16x32xf32>
    %165 = tpu.matmul %162, %164, %cst_32 {dimension_numbers = #tpu.dot_dimension_numbers<[1], [0], [0], [1], [0, 0, 1, 1], [], []>} : vector<16x32xbf16>, vector<32x32xbf16>, vector<16x32xf32> -> vector<16x32xf32>
    %166 = vector.broadcast %11 : vector<1x32xf32> to vector<16x32xf32>
    %167 = arith.addf %165, %166 : vector<16x32xf32>
    %168 = arith.addf %3, %167 : vector<16x32xf32>
    %cst_33 = arith.constant dense<0.000000e+00> : vector<16xf32>
    %169 = vector.multi_reduction <add>, %168, %cst_33 [1] : vector<16x32xf32> to vector<16xf32>
    %170 = vector.shape_cast %169 : vector<16xf32> to vector<16x1xf32>
    %cst_34 = arith.constant 3.200000e+01 : f32
    %171 = vector.broadcast %cst_34 : f32 to vector<16x1xf32>
    %172 = arith.divf %170, %171 : vector<16x1xf32>
    %173 = vector.broadcast %172 : vector<16x1xf32> to vector<16x32xf32>
    %174 = arith.subf %168, %173 : vector<16x32xf32>
    %175 = arith.mulf %174, %174 : vector<16x32xf32>
    %cst_35 = arith.constant dense<0.000000e+00> : vector<16xf32>
    %176 = vector.multi_reduction <add>, %175, %cst_35 [1] : vector<16x32xf32> to vector<16xf32>
    %177 = vector.shape_cast %176 : vector<16xf32> to vector<16x1xf32>
    %cst_36 = arith.constant 0.0322580636 : f32
    %178 = vector.broadcast %cst_36 : f32 to vector<16x1xf32>
    %179 = arith.mulf %177, %178 : vector<16x1xf32>
    %180 = vector.broadcast %172 : vector<16x1xf32> to vector<16x32xf32>
    %181 = arith.subf %168, %180 : vector<16x32xf32>
    %182 = vector.broadcast %8 : vector<1x32xf32> to vector<16x32xf32>
    %183 = arith.mulf %182, %181 : vector<16x32xf32>
    %184 = math.sqrt %179 : vector<16x1xf32>
    %cst_37 = arith.constant 9.99999997E-7 : f32
    %185 = vector.broadcast %cst_37 : f32 to vector<16x1xf32>
    %186 = arith.addf %184, %185 : vector<16x1xf32>
    %187 = vector.broadcast %186 : vector<16x1xf32> to vector<16x32xf32>
    %188 = arith.divf %183, %187 : vector<16x32xf32>
    %189 = vector.broadcast %9 : vector<1x32xf32> to vector<16x32xf32>
    %190 = arith.addf %188, %189 : vector<16x32xf32>
    %191 = arith.truncf %190 : vector<16x32xf32> to vector<16x32xbf16>
    %c0_38 = arith.constant 0 : index
    %c0_39 = arith.constant 0 : index
    %c0_40 = arith.constant 0 : index
    %192 = vector.load %arg6[%c0_38, %c0_39, %c0_40] : memref<1x32x64xbf16, #tpu.memory_space<vmem>>, vector<1x32x64xbf16>
    %193 = vector.shape_cast %192 : vector<1x32x64xbf16> to vector<32x64xbf16>
    %cst_41 = arith.constant dense<0.000000e+00> : vector<16x64xf32>
    %194 = tpu.matmul %191, %193, %cst_41 {dimension_numbers = #tpu.dot_dimension_numbers<[1], [0], [0], [1], [0, 0, 1, 1], [], []>} : vector<16x32xbf16>, vector<32x64xbf16>, vector<16x64xf32> -> vector<16x64xf32>
    %195 = vector.broadcast %12 : vector<1x64xf32> to vector<16x64xf32>
    %196 = arith.addf %194, %195 : vector<16x64xf32>
    %cst_42 = arith.constant 0.000000e+00 : f32
    %197 = vector.broadcast %cst_42 : f32 to vector<16x64xf32>
    %198 = arith.maximumf %196, %197 : vector<16x64xf32>
    %199 = arith.truncf %198 : vector<16x64xf32> to vector<16x64xbf16>
    %c0_43 = arith.constant 0 : index
    %c0_44 = arith.constant 0 : index
    %c0_45 = arith.constant 0 : index
    %200 = vector.load %arg7[%c0_43, %c0_44, %c0_45] : memref<1x64x32xbf16, #tpu.memory_space<vmem>>, vector<1x64x32xbf16>
    %201 = vector.shape_cast %200 : vector<1x64x32xbf16> to vector<64x32xbf16>
    %cst_46 = arith.constant dense<0.000000e+00> : vector<16x32xf32>
    %202 = tpu.matmul %199, %201, %cst_46 {dimension_numbers = #tpu.dot_dimension_numbers<[1], [0], [0], [1], [0, 0, 1, 1], [], []>} : vector<16x64xbf16>, vector<64x32xbf16>, vector<16x32xf32> -> vector<16x32xf32>
    %203 = vector.broadcast %13 : vector<1x32xf32> to vector<16x32xf32>
    %204 = arith.addf %202, %203 : vector<16x32xf32>
    %205 = arith.addf %168, %204 : vector<16x32xf32>
    %c0_47 = arith.constant 0 : index
    %c0_48 = arith.constant 0 : index
    %206 = vector.load %arg12[%c0_47, %c0_48] : memref<16x32xf32, #tpu.memory_space<vmem>>, vector<16x32xf32>
    tpu.vector_store %arg12[%c0_47, %c0_48], %205 {strides = array<i32>} : memref<16x32xf32, #tpu.memory_space<vmem>>, vector<16x32xf32>,
    %c1_i32 = arith.constant 1 : i32
    %207 = arith.cmpi eq, %arg1, %c1_i32 : i32
    %208 = arith.extui %207 : i1 to i32
    %c0_i32_49 = arith.constant 0 : i32
    %209 = arith.cmpi ne, %208, %c0_i32_49 : i32
    scf.if %209 {
      %c0_50 = arith.constant 0 : index
      %c0_51 = arith.constant 0 : index
      %210 = vector.load %arg9[%c0_50, %c0_51] : memref<1x32xf32, #tpu.memory_space<vmem>>, vector<1x32xf32>
      %c0_52 = arith.constant 0 : index
      %c0_53 = arith.constant 0 : index
      %211 = vector.load %arg10[%c0_52, %c0_53] : memref<1x32xf32, #tpu.memory_space<vmem>>, vector<1x32xf32>
      %cst_54 = arith.constant dense<0.000000e+00> : vector<16xf32>
      %212 = vector.multi_reduction <add>, %205, %cst_54 [1] : vector<16x32xf32> to vector<16xf32>
      %213 = vector.shape_cast %212 : vector<16xf32> to vector<16x1xf32>
      %cst_55 = arith.constant 3.200000e+01 : f32
      %214 = vector.broadcast %cst_55 : f32 to vector<16x1xf32>
      %215 = arith.divf %213, %214 : vector<16x1xf32>
      %216 = vector.broadcast %215 : vector<16x1xf32> to vector<16x32xf32>
      %217 = arith.subf %205, %216 : vector<16x32xf32>
      %218 = arith.mulf %217, %217 : vector<16x32xf32>
      %cst_56 = arith.constant dense<0.000000e+00> : vector<16xf32>
      %219 = vector.multi_reduction <add>, %218, %cst_56 [1] : vector<16x32xf32> to vector<16xf32>
      %220 = vector.shape_cast %219 : vector<16xf32> to vector<16x1xf32>
      %cst_57 = arith.constant 0.0322580636 : f32
      %221 = vector.broadcast %cst_57 : f32 to vector<16x1xf32>
      %222 = arith.mulf %220, %221 : vector<16x1xf32>
      %223 = vector.broadcast %215 : vector<16x1xf32> to vector<16x32xf32>
      %224 = arith.subf %205, %223 : vector<16x32xf32>
      %225 = vector.broadcast %210 : vector<1x32xf32> to vector<16x32xf32>
      %226 = arith.mulf %225, %224 : vector<16x32xf32>
      %227 = math.sqrt %222 : vector<16x1xf32>
      %cst_58 = arith.constant 9.99999997E-7 : f32
      %228 = vector.broadcast %cst_58 : f32 to vector<16x1xf32>
      %229 = arith.addf %227, %228 : vector<16x1xf32>
      %230 = vector.broadcast %229 : vector<16x1xf32> to vector<16x32xf32>
      %231 = arith.divf %226, %230 : vector<16x32xf32>
      %232 = vector.broadcast %211 : vector<1x32xf32> to vector<16x32xf32>
      %233 = arith.addf %231, %232 : vector<16x32xf32>
      %c0_59 = arith.constant 0 : index
      %c0_60 = arith.constant 0 : index
      %234 = vector.load %arg11[%c0_59, %c0_60] : memref<16x32xf32, #tpu.memory_space<vmem>>, vector<16x32xf32>
      tpu.vector_store %arg11[%c0_59, %c0_60], %233 {strides = array<i32>} : memref<16x32xf32, #tpu.memory_space<vmem>>, vector<16x32xf32>,
    } else {
    }
    return
  }
  func.func @transform_0(%arg0: i32, %arg1: i32) -> (i32, i32) {
    %c0_i32 = arith.constant 0 : i32
    %c0_i32_0 = arith.constant 0 : i32
    return %arg0, %c0_i32 : i32, i32
  }
  func.func @transform_1(%arg0: i32, %arg1: i32) -> (i32, i32, i32) {
    %c0_i32 = arith.constant 0 : i32
    %c0_i32_0 = arith.constant 0 : i32
    %c0_i32_1 = arith.constant 0 : i32
    return %arg0, %c0_i32, %c0_i32_0 : i32, i32, i32
  }
  func.func @transform_2(%arg0: i32, %arg1: i32) -> (i32, i32, i32) {
    %c0_i32 = arith.constant 0 : i32
    %c0_i32_0 = arith.constant 0 : i32
    %c0_i32_1 = arith.constant 0 : i32
    return %arg1, %c0_i32, %c0_i32_0 : i32, i32, i32
  }
  func.func @transform_3(%arg0: i32, %arg1: i32) -> (i32, i32, i32) {
    %c0_i32 = arith.constant 0 : i32
    %c0_i32_0 = arith.constant 0 : i32
    %c0_i32_1 = arith.constant 0 : i32
    return %arg1, %c0_i32, %c0_i32_0 : i32, i32, i32
  }
  func.func @transform_4(%arg0: i32, %arg1: i32) -> (i32, i32, i32) {
    %c0_i32 = arith.constant 0 : i32
    %c0_i32_0 = arith.constant 0 : i32
    %c0_i32_1 = arith.constant 0 : i32
    return %arg1, %c0_i32, %c0_i32_0 : i32, i32, i32
  }
  func.func @transform_5(%arg0: i32, %arg1: i32) -> (i32, i32, i32) {
    %c0_i32 = arith.constant 0 : i32
    %c0_i32_0 = arith.constant 0 : i32
    %c0_i32_1 = arith.constant 0 : i32
    return %arg1, %c0_i32, %c0_i32_0 : i32, i32, i32
  }
  func.func @transform_6(%arg0: i32, %arg1: i32) -> (i32, i32, i32) {
    %c0_i32 = arith.constant 0 : i32
    %c0_i32_0 = arith.constant 0 : i32
    %c0_i32_1 = arith.constant 0 : i32
    return %arg1, %c0_i32, %c0_i32_0 : i32, i32, i32
  }
  func.func @transform_7(%arg0: i32, %arg1: i32) -> (i32, i32) {
    %c0_i32 = arith.constant 0 : i32
    %c0_i32_0 = arith.constant 0 : i32
    %c0_i32_1 = arith.constant 0 : i32
    return %c0_i32, %c0_i32_0 : i32, i32
  }
  func.func @transform_8(%arg0: i32, %arg1: i32) -> (i32, i32) {
    %c0_i32 = arith.constant 0 : i32
    %c0_i32_0 = arith.constant 0 : i32
    %c0_i32_1 = arith.constant 0 : i32
    return %c0_i32, %c0_i32_0 : i32, i32
  }
  func.func @transform_9(%arg0: i32, %arg1: i32) -> (i32, i32) {
    %c0_i32 = arith.constant 0 : i32
    %c0_i32_0 = arith.constant 0 : i32
    return %arg0, %c0_i32 : i32, i32
  }
}

</mosaic_0001>

<llo_original>
// kernel: tpu_custom_call.1
$region0: #{tpu_custom_call.1}
  #allocation0 [shape = 'u32[]', space=smem, size = 0x4, offset = 0x4, fixed_abs, tag = 'smem constant byte address 0x4 - core index']
  #allocation1 [shape = 'u32[144,128]{1,0:T(1,128)}', space=vmem, size = 0x12000, scoped, tag = 'internal scratch']
  #allocation2 [shape = 'f32[16,32]{1,0:T(8,128)}', space=vmem, size = 0x2000, scoped, tag = 'scratch operand']
  %s0 = inlined_call_operand.hbm [shape: f32[16,32], index: 0, kind: input, shape index: {}]
  %s1 = inlined_call_operand.vmem [shape: f32[2,1,8], index: 1, kind: input, shape index: {}]
  %s2 = inlined_call_operand.vmem [shape: bf16[2,32,96], index: 2, kind: input, shape index: {}]
  %s3 = inlined_call_operand.vmem [shape: bf16[2,32,32], index: 3, kind: input, shape index: {}]
  %s4 = inlined_call_operand.vmem [shape: bf16[2,32,64], index: 4, kind: input, shape index: {}]
  %s5 = inlined_call_operand.vmem [shape: bf16[2,64,32], index: 5, kind: input, shape index: {}]
  %s6 = inlined_call_operand.vmem [shape: f32[2,8,96], index: 6, kind: input, shape index: {}]
  %s7 = inlined_call_operand.vmem [shape: f32[1,32], index: 7, kind: input, shape index: {}]
  %s8 = inlined_call_operand.vmem [shape: f32[1,32], index: 8, kind: input, shape index: {}]
  %s9 = inlined_call_operand.hbm [shape: f32[16,32], index: 9, kind: output, shape index: {}]
  %s10 = sld [smem:[#allocation0]]
  $region81: #{tpu_custom_call.1} parent=0
    _
  %s12 = ssub.s32 1, %s10
  %s13 = scalar_select 0, %s12, %s10
  $region1: #{tpu_custom_call.1} parent=0
    #allocation3 [shape = 'u8[8192]{0}', space=vmem, size = 0x2000, scoped, tag = 'input window, operand 0, single buffered']
    #allocation4 [shape = 's32[2]{0}', space=sflag, size = 0x8, scoped, tag = 'scoped memory for tpu_custom_call.1']
    #allocation5 [shape = 's32[2]{0}', space=sflag, size = 0x8, scoped, tag = 'scoped memory for tpu_custom_call.1']
    #allocation6 [shape = 'u8[8192]{0}', space=vmem, size = 0x2000, scoped, tag = 'output window, operand 0, single buffered']
    %14 = vsyncpa [#allocation4], 0
    %15 = vsyncpa [#allocation5], 0
    loop: start=0, step=1, limit=4
    $region2: #{tpu_custom_call.1} parent=1 // loop_pre_header
      _
    $region3: #{tpu_custom_call.1} parent=1 // loop_header
      %s17 = sphi 0, %s21
      %p18 = scmp.ge.s32.totalorder %s17, 4
      %s24 = sphi 0, %s36
      %s25 = sphi 0, %s32
      %s26 = sphi 0, %s24
      %s27 = sphi 0, %s25
      %s28 = sphi 0, %s26
      %s29 = sphi 0, %s27
      %s39 = sphi 0, %s41
      %s42 = sphi 0, %s39
      %s43 = sphi 0, %s42
      %s59 = sphi 0, %s43
      %s65 = sphi 0, %s67
      %s68 = sphi 0, %s65
      %s69 = sphi 0, %s68
      %s85 = sphi 0, %s69
      %s91 = sphi 0, %s93
      %s94 = sphi 0, %s91
      %s95 = sphi 0, %s94
      %s111 = sphi 0, %s95
      %s117 = sphi 0, %s119
      %s120 = sphi 0, %s117
      %s121 = sphi 0, %s120
      %s137 = sphi 0, %s121
      %s143 = sphi 0, %s145
      %s146 = sphi 0, %s143
      %s147 = sphi 0, %s146
      %s163 = sphi 0, %s147
      %s169 = sphi 0, %s171
      %s172 = sphi 0, %s169
      %s173 = sphi 0, %s172
      %s189 = sphi 0, %s173
      %s195 = sphi 0, %s197
      %s198 = sphi 0, %s195
      %s199 = sphi 0, %s198
      %s215 = sphi 0, %s199
      %s219 = sphi 0, %s219
      %s221 = sphi 0, %s219
      %s222 = sphi 0, %s221
      %s236 = sphi 0, %s222
      %s240 = sphi 0, %s240
      %s242 = sphi 0, %s240
      %s243 = sphi 0, %s242
      %s257 = sphi 0, %s243
      %s263 = sphi 0, %s265
      %s266 = sphi 0, %s263
      %s267 = sphi 0, %s266
      %s283 = sphi 0, %s267
    $region4: #{tpu_custom_call.1} parent=1 // loop_header_branch
      %20 = sbr.rel (%p18) target = $region8
    $region5: #{tpu_custom_call.1} parent=1 // loop_body
      %s22 = ssub.s32 %s17, 1
      %s23 = ssub.s32 %s17, 2
      %s30 = sadd.s32 1, %s25
      %p31 = scmp.ge.s32.totalorder %s30, 2
      %s32 = scalar_select %p31, 0, %s30
      %s33 = sadd.s32 1, %s24
      %s34 = scalar_select %p31, %s33, %s24
      %p35 = scmp.ge.s32.totalorder %s34, 1
      %s36 = scalar_select %p35, 0, %s34
      %s37 = ssub.s32 %s24, %s36
      %p38 = scmp.eq.s32.totalorder %s37, 0
      %s40 = sadd.s32 %s39, 1
      %s41 = scalar_select %p38, %s39, %s40
      %p44 = pneg %p38
      %p45 = scmp.eq.s32.totalorder %s17, 1
      %p46 = por %p44, %p45
      %p47 = scmp.ne.s32.totalorder %s39, %s42
      %p48 = scmp.eq.s32.totalorder %s17, 0
      %p49 = por %p47, %p48
      %p50 = scmp.ne.s32.totalorder %s39, %s42
      %p51 = scmp.eq.s32.totalorder %s22, 1
      %p52 = por %p50, %p51
      %p53 = scmp.ne.s32.totalorder %s42, %s43
      %p54 = scmp.eq.s32.totalorder %s22, 0
      %p55 = por %p53, %p54
      %p56 = scmp.ne.s32.totalorder %s42, %s43
      %p57 = scmp.eq.s32.totalorder %s23, 1
      %p58 = por %p56, %p57
      %p60 = scmp.ne.s32.totalorder %s43, %s59
      %p61 = scmp.eq.s32.totalorder %s23, 0
      %p62 = por %p60, %p61
      %s63 = ssub.s32 %s24, %s36
      %p64 = scmp.eq.s32.totalorder %s63, 0
      %s66 = sadd.s32 %s65, 1
      %s67 = scalar_select %p64, %s65, %s66
      %p70 = pneg %p64
      %p71 = scmp.eq.s32.totalorder %s17, 1
      %p72 = por %p70, %p71
      %p73 = scmp.ne.s32.totalorder %s65, %s68
      %p74 = scmp.eq.s32.totalorder %s17, 0
      %p75 = por %p73, %p74
      %p76 = scmp.ne.s32.totalorder %s65, %s68
      %p77 = scmp.eq.s32.totalorder %s22, 1
      %p78 = por %p76, %p77
      %p79 = scmp.ne.s32.totalorder %s68, %s69
      %p80 = scmp.eq.s32.totalorder %s22, 0
      %p81 = por %p79, %p80
      %p82 = scmp.ne.s32.totalorder %s68, %s69
      %p83 = scmp.eq.s32.totalorder %s23, 1
      %p84 = por %p82, %p83
      %p86 = scmp.ne.s32.totalorder %s69, %s85
      %p87 = scmp.eq.s32.totalorder %s23, 0
      %p88 = por %p86, %p87
      %s89 = ssub.s32 %s25, %s32
      %p90 = scmp.eq.s32.totalorder %s89, 0
      %s92 = sadd.s32 %s91, 1
      %s93 = scalar_select %p90, %s91, %s92
      %p96 = pneg %p90
      %p97 = scmp.eq.s32.totalorder %s17, 1
      %p98 = por %p96, %p97
      %p99 = scmp.ne.s32.totalorder %s91, %s94
      %p100 = scmp.eq.s32.totalorder %s17, 0
      %p101 = por %p99, %p100
      %p102 = scmp.ne.s32.totalorder %s91, %s94
      %p103 = scmp.eq.s32.totalorder %s22, 1
      %p104 = por %p102, %p103
      %p105 = scmp.ne.s32.totalorder %s94, %s95
      %p106 = scmp.eq.s32.totalorder %s22, 0
      %p107 = por %p105, %p106
      %p108 = scmp.ne.s32.totalorder %s94, %s95
      %p109 = scmp.eq.s32.totalorder %s23, 1
      %p110 = por %p108, %p109
      %p112 = scmp.ne.s32.totalorder %s95, %s111
      %p113 = scmp.eq.s32.totalorder %s23, 0
      %p114 = por %p112, %p113
      %s115 = ssub.s32 %s25, %s32
      %p116 = scmp.eq.s32.totalorder %s115, 0
      %s118 = sadd.s32 %s117, 1
      %s119 = scalar_select %p116, %s117, %s118
      %p122 = pneg %p116
      %p123 = scmp.eq.s32.totalorder %s17, 1
      %p124 = por %p122, %p123
      %p125 = scmp.ne.s32.totalorder %s117, %s120
      %p126 = scmp.eq.s32.totalorder %s17, 0
      %p127 = por %p125, %p126
      %p128 = scmp.ne.s32.totalorder %s117, %s120
      %p129 = scmp.eq.s32.totalorder %s22, 1
      %p130 = por %p128, %p129
      %p131 = scmp.ne.s32.totalorder %s120, %s121
      %p132 = scmp.eq.s32.totalorder %s22, 0
      %p133 = por %p131, %p132
      %p134 = scmp.ne.s32.totalorder %s120, %s121
      %p135 = scmp.eq.s32.totalorder %s23, 1
      %p136 = por %p134, %p135
      %p138 = scmp.ne.s32.totalorder %s121, %s137
      %p139 = scmp.eq.s32.totalorder %s23, 0
      %p140 = por %p138, %p139
      %s141 = ssub.s32 %s25, %s32
      %p142 = scmp.eq.s32.totalorder %s141, 0
      %s144 = sadd.s32 %s143, 1
      %s145 = scalar_select %p142, %s143, %s144
      %p148 = pneg %p142
      %p149 = scmp.eq.s32.totalorder %s17, 1
      %p150 = por %p148, %p149
      %p151 = scmp.ne.s32.totalorder %s143, %s146
      %p152 = scmp.eq.s32.totalorder %s17, 0
      %p153 = por %p151, %p152
      %p154 = scmp.ne.s32.totalorder %s143, %s146
      %p155 = scmp.eq.s32.totalorder %s22, 1
      %p156 = por %p154, %p155
      %p157 = scmp.ne.s32.totalorder %s146, %s147
      %p158 = scmp.eq.s32.totalorder %s22, 0
      %p159 = por %p157, %p158
      %p160 = scmp.ne.s32.totalorder %s146, %s147
      %p161 = scmp.eq.s32.totalorder %s23, 1
      %p162 = por %p160, %p161
      %p164 = scmp.ne.s32.totalorder %s147, %s163
      %p165 = scmp.eq.s32.totalorder %s23, 0
      %p166 = por %p164, %p165
      %s167 = ssub.s32 %s25, %s32
      %p168 = scmp.eq.s32.totalorder %s167, 0
      %s170 = sadd.s32 %s169, 1
      %s171 = scalar_select %p168, %s169, %s170
      %p174 = pneg %p168
      %p175 = scmp.eq.s32.totalorder %s17, 1
      %p176 = por %p174, %p175
      %p177 = scmp.ne.s32.totalorder %s169, %s172
      %p178 = scmp.eq.s32.totalorder %s17, 0
      %p179 = por %p177, %p178
      %p180 = scmp.ne.s32.totalorder %s169, %s172
      %p181 = scmp.eq.s32.totalorder %s22, 1
      %p182 = por %p180, %p181
      %p183 = scmp.ne.s32.totalorder %s172, %s173
      %p184 = scmp.eq.s32.totalorder %s22, 0
      %p185 = por %p183, %p184
      %p186 = scmp.ne.s32.totalorder %s172, %s173
      %p187 = scmp.eq.s32.totalorder %s23, 1
      %p188 = por %p186, %p187
      %p190 = scmp.ne.s32.totalorder %s173, %s189
      %p191 = scmp.eq.s32.totalorder %s23, 0
      %p192 = por %p190, %p191
      %s193 = ssub.s32 %s25, %s32
      %p194 = scmp.eq.s32.totalorder %s193, 0
      %s196 = sadd.s32 %s195, 1
      %s197 = scalar_select %p194, %s195, %s196
      %p200 = pneg %p194
      %p201 = scmp.eq.s32.totalorder %s17, 1
      %p202 = por %p200, %p201
      %p203 = scmp.ne.s32.totalorder %s195, %s198
      %p204 = scmp.eq.s32.totalorder %s17, 0
      %p205 = por %p203, %p204
      %p206 = scmp.ne.s32.totalorder %s195, %s198
      %p207 = scmp.eq.s32.totalorder %s22, 1
      %p208 = por %p206, %p207
      %p209 = scmp.ne.s32.totalorder %s198, %s199
      %p210 = scmp.eq.s32.totalorder %s22, 0
      %p211 = por %p209, %p210
      %p212 = scmp.ne.s32.totalorder %s198, %s199
      %p213 = scmp.eq.s32.totalorder %s23, 1
      %p214 = por %p212, %p213
      %p216 = scmp.ne.s32.totalorder %s199, %s215
      %p217 = scmp.eq.s32.totalorder %s23, 0
      %p218 = por %p216, %p217
      %s220 = sadd.s32 %s219, 1
      %p223 = scmp.eq.s32.totalorder %s17, 1
      %p224 = scmp.ne.s32.totalorder %s219, %s221
      %p225 = scmp.eq.s32.totalorder %s17, 0
      %p226 = por %p224, %p225
      %p227 = scmp.ne.s32.totalorder %s219, %s221
      %p228 = scmp.eq.s32.totalorder %s22, 1
      %p229 = por %p227, %p228
      %p230 = scmp.ne.s32.totalorder %s221, %s222
      %p231 = scmp.eq.s32.totalorder %s22, 0
      %p232 = por %p230, %p231
      %p233 = scmp.ne.s32.totalorder %s221, %s222
      %p234 = scmp.eq.s32.totalorder %s23, 1
      %p235 = por %p233, %p234
      %p237 = scmp.ne.s32.totalorder %s222, %s236
      %p238 = scmp.eq.s32.totalorder %s23, 0
      %p239 = por %p237, %p238
      %s241 = sadd.s32 %s240, 1
      %p244 = scmp.eq.s32.totalorder %s17, 1
      %p245 = scmp.ne.s32.totalorder %s240, %s242
      %p246 = scmp.eq.s32.totalorder %s17, 0
      %p247 = por %p245, %p246
      %p248 = scmp.ne.s32.totalorder %s240, %s242
      %p249 = scmp.eq.s32.totalorder %s22, 1
      %p250 = por %p248, %p249
      %p251 = scmp.ne.s32.totalorder %s242, %s243
      %p252 = scmp.eq.s32.totalorder %s22, 0
      %p253 = por %p251, %p252
      %p254 = scmp.ne.s32.totalorder %s242, %s243
      %p255 = scmp.eq.s32.totalorder %s23, 1
      %p256 = por %p254, %p255
      %p258 = scmp.ne.s32.totalorder %s243, %s257
      %p259 = scmp.eq.s32.totalorder %s23, 0
      %p260 = por %p258, %p259
      %s261 = ssub.s32 %s24, %s36
      %p262 = scmp.eq.s32.totalorder %s261, 0
      %s264 = sadd.s32 %s263, 1
      %s265 = scalar_select %p262, %s263, %s264
      %p268 = pneg %p262
      %p269 = scmp.eq.s32.totalorder %s17, 1
      %p270 = por %p268, %p269
      %p271 = scmp.ne.s32.totalorder %s263, %s266
      %p272 = scmp.eq.s32.totalorder %s17, 0
      %p273 = por %p271, %p272
      %p274 = scmp.ne.s32.totalorder %s263, %s266
      %p275 = scmp.eq.s32.totalorder %s22, 1
      %p276 = por %p274, %p275
      %p277 = scmp.ne.s32.totalorder %s266, %s267
      %p278 = scmp.eq.s32.totalorder %s22, 0
      %p279 = por %p277, %p278
      %p280 = scmp.ne.s32.totalorder %s266, %s267
      %p281 = scmp.eq.s32.totalorder %s23, 1
      %p282 = por %p280, %p281
      %p284 = scmp.ne.s32.totalorder %s267, %s283
      %p285 = scmp.eq.s32.totalorder %s23, 0
      %p286 = por %p284, %p285
      %p287 = scmp.le.s32.totalorder 1, %s17
      %p288 = scmp.lt.s32.totalorder %s17, 3
      %p289 = pnand %p287, %p288
      %p290 = pneg %p289
      // Predicated region
      $region9: #{tpu_custom_call.1} parent=5 // pred_check
        _
      $region10: #{tpu_custom_call.1} parent=5 // pred_check_branch
        %292 = sbr.rel (%p289) target = $region12
      $region11: #{tpu_custom_call.1} parent=5 // pred_region
        %s293 = ssub.s32 %s17, 1
        // Predicated region
        $region13: #{tpu_custom_call.1} parent=11 // pred_check
          %p294 = pneg %p55
        $region14: #{tpu_custom_call.1} parent=11 // pred_check_branch
          %296 = sbr.rel (%p294) target = $region16
        $region15: #{tpu_custom_call.1} parent=11 // pred_region
          %s297 = smul.u32 2, %s26
          %s299 = ssub.s32 256, 256
          %300 = vsyncadd [#allocation4], %s299
          %s301 = smul.addr %s297, 128
          %s302 = scalar_lea.hbm %s0, %s301
          %s303 = sshll.u32 [#allocation3], 4
          %s304 = int_to_ptr.vmem [resolvable:$true] %s303
          %309 = dma.hbm_to_vmem [thread:$0]  %s302, 256, %s304, [#allocation4], 128, 128, 8
        $region16: #{tpu_custom_call.1} parent=11 // pred_fallthru
          _
        // Predicated region
        $region17: #{tpu_custom_call.1} parent=11 // pred_check
          %p310 = pneg %p81
        $region18: #{tpu_custom_call.1} parent=11 // pred_check_branch
          %312 = sbr.rel (%p310) target = $region20
        $region19: #{tpu_custom_call.1} parent=11 // pred_region
          %s313 = smul.u32 2, %s26
          %p314 = scmp.lt.s32.totalorder %s313, 1
          %s315 = scalar_select %p314, %s313, 1
          %s316 = scalar_lea.vmem %s1, %s315
          %s317 = smul.u32 2, %s26
        $region20: #{tpu_custom_call.1} parent=11 // pred_fallthru
          _
        // Predicated region
        $region21: #{tpu_custom_call.1} parent=11 // pred_check
          %p318 = pneg %p232
        $region22: #{tpu_custom_call.1} parent=11 // pred_check_branch
          %320 = sbr.rel (%p318) target = $region24
        $region23: #{tpu_custom_call.1} parent=11 // pred_region
          _
        $region24: #{tpu_custom_call.1} parent=11 // pred_fallthru
          _
        // Predicated region
        $region25: #{tpu_custom_call.1} parent=11 // pred_check
          %p321 = pneg %p253
        $region26: #{tpu_custom_call.1} parent=11 // pred_check_branch
          %323 = sbr.rel (%p321) target = $region28
        $region27: #{tpu_custom_call.1} parent=11 // pred_region
          _
        $region28: #{tpu_custom_call.1} parent=11 // pred_fallthru
          _
      $region12: #{tpu_custom_call.1} parent=5 // pred_fallthru
        _
      %p324 = scmp.lt.s32.totalorder %s17, 2
      // Predicated region
      $region29: #{tpu_custom_call.1} parent=5 // pred_check
        %p325 = pneg %p324
      $region30: #{tpu_custom_call.1} parent=5 // pred_check_branch
        %327 = sbr.rel (%p325) target = $region32
      $region31: #{tpu_custom_call.1} parent=5 // pred_region
        // Predicated region
        $region33: #{tpu_custom_call.1} parent=31 // pred_check
          %p328 = pneg %p101
        $region34: #{tpu_custom_call.1} parent=31 // pred_check_branch
          %330 = sbr.rel (%p328) target = $region36
        $region35: #{tpu_custom_call.1} parent=31 // pred_region
          %p331 = scmp.lt.s32.totalorder %s25, 1
          %s332 = scalar_select %p331, %s25, 1
          %s333 = smul.addr %s332, 4
          %s334 = smul.addr %s333, 4
          %s335 = scalar_lea.vmem %s2, %s334
        $region36: #{tpu_custom_call.1} parent=31 // pred_fallthru
          _
        // Predicated region
        $region37: #{tpu_custom_call.1} parent=31 // pred_check
          %p336 = pneg %p127
        $region38: #{tpu_custom_call.1} parent=31 // pred_check_branch
          %338 = sbr.rel (%p336) target = $region40
        $region39: #{tpu_custom_call.1} parent=31 // pred_region
          %p339 = scmp.lt.s32.totalorder %s25, 1
          %s340 = scalar_select %p339, %s25, 1
          %s341 = smul.addr %s340, 4
          %s342 = smul.addr %s341, 4
          %s343 = scalar_lea.vmem %s3, %s342
        $region40: #{tpu_custom_call.1} parent=31 // pred_fallthru
          _
        // Predicated region
        $region41: #{tpu_custom_call.1} parent=31 // pred_check
          %p344 = pneg %p153
        $region42: #{tpu_custom_call.1} parent=31 // pred_check_branch
          %346 = sbr.rel (%p344) target = $region44
        $region43: #{tpu_custom_call.1} parent=31 // pred_region
          %p347 = scmp.lt.s32.totalorder %s25, 1
          %s348 = scalar_select %p347, %s25, 1
          %s349 = smul.addr %s348, 4
          %s350 = smul.addr %s349, 4
          %s351 = scalar_lea.vmem %s4, %s350
        $region44: #{tpu_custom_call.1} parent=31 // pred_fallthru
          _
        // Predicated region
        $region45: #{tpu_custom_call.1} parent=31 // pred_check
          %p352 = pneg %p179
        $region46: #{tpu_custom_call.1} parent=31 // pred_check_branch
          %354 = sbr.rel (%p352) target = $region48
        $region47: #{tpu_custom_call.1} parent=31 // pred_region
          %p355 = scmp.lt.s32.totalorder %s25, 1
          %s356 = scalar_select %p355, %s25, 1
          %s357 = smul.addr %s356, 8
          %s358 = smul.addr %s357, 4
          %s359 = scalar_lea.vmem %s5, %s358
        $region48: #{tpu_custom_call.1} parent=31 // pred_fallthru
          _
        // Predicated region
        $region49: #{tpu_custom_call.1} parent=31 // pred_check
          %p360 = pneg %p205
        $region50: #{tpu_custom_call.1} parent=31 // pred_check_branch
          %362 = sbr.rel (%p360) target = $region52
        $region51: #{tpu_custom_call.1} parent=31 // pred_region
          %p363 = scmp.lt.s32.totalorder %s25, 1
          %s364 = scalar_select %p363, %s25, 1
          %s365 = smul.addr %s364, 8
          %s366 = scalar_lea.vmem %s6, %s365
        $region52: #{tpu_custom_call.1} parent=31 // pred_fallthru
          _
      $region32: #{tpu_custom_call.1} parent=5 // pred_fallthru
        _
      %p367 = scmp.le.s32.totalorder 1, %s17
      %p368 = scmp.lt.s32.totalorder %s17, 3
      %p369 = pnand %p367, %p368
      %p370 = pneg %p369
      // Predicated region
      $region53: #{tpu_custom_call.1} parent=5 // pred_check
        _
      $region54: #{tpu_custom_call.1} parent=5 // pred_check_branch
        %372 = sbr.rel (%p369) target = $region56
      $region55: #{tpu_custom_call.1} parent=5 // pred_region
        %s373 = ssub.s32 %s17, 1
        // Predicated region
        $region57: #{tpu_custom_call.1} parent=55 // pred_check
          %p374 = pneg %p55
        $region58: #{tpu_custom_call.1} parent=55 // pred_check_branch
          %376 = sbr.rel (%p374) target = $region60
        $region59: #{tpu_custom_call.1} parent=55 // pred_region
          %377 = dma.done [#allocation4], 256
        $region60: #{tpu_custom_call.1} parent=55 // pred_fallthru
          _
        %p378 = pneg %p55
        %p379 = pneg %p52
        %s380 = smul.u32 2, %s26
        %p381 = scmp.lt.s32.totalorder %s380, 1
        %s382 = scalar_select %p381, %s380, 1
        %s383 = scalar_lea.vmem %s1, %s382
        %p384 = pneg %p81
        %p385 = pneg %p78
        %p386 = scmp.lt.s32.totalorder %s27, 1
        %s387 = scalar_select %p386, %s27, 1
        %s388 = smul.addr %s387, 4
        %s389 = smul.addr %s388, 4
        %s390 = scalar_lea.vmem %s2, %s389
        %p391 = pneg %p107
        %p392 = pneg %p104
        %p393 = scmp.lt.s32.totalorder %s27, 1
        %s394 = scalar_select %p393, %s27, 1
        %s395 = smul.addr %s394, 4
        %s396 = smul.addr %s395, 4
        %s397 = scalar_lea.vmem %s3, %s396
        %p398 = pneg %p133
        %p399 = pneg %p130
        %p400 = scmp.lt.s32.totalorder %s27, 1
        %s401 = scalar_select %p400, %s27, 1
        %s402 = smul.addr %s401, 4
        %s403 = smul.addr %s402, 4
        %s404 = scalar_lea.vmem %s4, %s403
        %p405 = pneg %p159
        %p406 = pneg %p156
        %p407 = scmp.lt.s32.totalorder %s27, 1
        %s408 = scalar_select %p407, %s27, 1
        %s409 = smul.addr %s408, 8
        %s410 = smul.addr %s409, 4
        %s411 = scalar_lea.vmem %s5, %s410
        %p412 = pneg %p185
        %p413 = pneg %p182
        %p414 = scmp.lt.s32.totalorder %s27, 1
        %s415 = scalar_select %p414, %s27, 1
        %s416 = smul.addr %s415, 8
        %s417 = scalar_lea.vmem %s6, %s416
        %p418 = pneg %p211
        %p419 = pneg %p208
        %p420 = pneg %p232
        %p421 = pneg %p229
        %p422 = pneg %p253
        %p423 = pneg %p250
        %p424 = pneg %p279
        %p425 = pneg %p276
        %s426 = smul.u32 2, %s26
        %s427 = smul.u32 2, %s26
        %p428 = scmp.lt.s32.totalorder %s427, 1
        %s429 = scalar_select %p428, %s427, 1
        %s430 = scalar_lea.vmem %s1, %s429
        %s431 = smul.u32 2, %s26
        %p432 = scmp.lt.s32.totalorder %s27, 1
        %s433 = scalar_select %p432, %s27, 1
        %s434 = smul.addr %s433, 4
        %s435 = smul.addr %s434, 4
        %s436 = scalar_lea.vmem %s2, %s435
        %p437 = scmp.lt.s32.totalorder %s27, 1
        %s438 = scalar_select %p437, %s27, 1
        %s439 = smul.addr %s438, 4
        %s440 = smul.addr %s439, 4
        %s441 = scalar_lea.vmem %s3, %s440
        %p442 = scmp.lt.s32.totalorder %s27, 1
        %s443 = scalar_select %p442, %s27, 1
        %s444 = smul.addr %s443, 4
        %s445 = smul.addr %s444, 4
        %s446 = scalar_lea.vmem %s4, %s445
        %p447 = scmp.lt.s32.totalorder %s27, 1
        %s448 = scalar_select %p447, %s27, 1
        %s449 = smul.addr %s448, 8
        %s450 = smul.addr %s449, 4
        %s451 = scalar_lea.vmem %s5, %s450
        %p452 = scmp.lt.s32.totalorder %s27, 1
        %s453 = scalar_select %p452, %s27, 1
        %s454 = smul.addr %s453, 8
        %s455 = scalar_lea.vmem %s6, %s454
        %s456 = smul.u32 2, %s26
        %p458 = scmp.eq.s32.totalorder %s27, 0
        // Predicated region
        $region61: #{tpu_custom_call.1} parent=55 // pred_check
          %p459 = pneg %p458
        $region62: #{tpu_custom_call.1} parent=55 // pred_check_branch
          %461 = sbr.rel (%p459) target = $region64
        $region63: #{tpu_custom_call.1} parent=55 // pred_region
          %v462 = vld [vmem:[#allocation3] sm:$0xff]
          %v463 = vld [vmem:[#allocation3 + $0x8] sm:$0xff]
          %vm464 = vcmask 261120
          %465 = vst.msk [vmem:[#allocation2] sm:$0xff] %vm464, %v462
          %466 = vst.msk [vmem:[#allocation2 + $0x8] sm:$0xff] %vm464, %v463
        $region64: #{tpu_custom_call.1} parent=55 // pred_fallthru
          _
        %v467 = vld [vmem:[#allocation2] sm:$0xff]
        %v468 = vld [vmem:[#allocation2 + $0x8] sm:$0xff]
        %v469 = vld [vmem:[%s455] sm:$0xff]
        %v470 = vld [vmem:[%s430] sm:$0x1]
        %v471 = vld [vmem:[%s430 + $0x1] sm:$0x1]
        %vm472 = vcmp.eq.f32.partialorder %v470, 0.0
        %vm473 = vcmp.eq.f32.partialorder %v471, 0.0
        %v474 = vsel %vm472, -1e+09, 0.0
        %v475 = vsel %vm473, -1e+09, 0.0
        %vm476 = vcmask 261120
        %v477 = vsel %vm476, %v467, 0.0
        %478 = vadd.xlane.f32.xlu0 %v477
        %v479 = vpop.xlane.xlu0 %478
        %v480 = vsel %vm476, %v468, 0.0
        %481 = vadd.xlane.f32.xlu0 %v480
        %v482 = vpop.xlane.xlu0 %481
        %v483 = vrcp.pop 32.0
        %v484 = vmul.f32 %v479, %v483
        %v485 = vmul.f32 %v482, %v483
        %v486 = vsub.f32 %v467, %v484
        %v487 = vsub.f32 %v468, %v485
        %v488 = vmul.f32 %v486, %v486
        %v489 = vmul.f32 %v487, %v487
        %v490 = vsel %vm476, %v488, 0.0
        %491 = vadd.xlane.f32.xlu0 %v490
        %v492 = vpop.xlane.xlu0 %491
        %v493 = vsel %vm476, %v489, 0.0
        %494 = vadd.xlane.f32.xlu0 %v493
        %v495 = vpop.xlane.xlu0 %494
        %v496 = vmul.f32 %v492, 0.032258064
        %v497 = vmul.f32 %v495, 0.032258064
        %v498 = vlaneseq
        %v499 = vshrl.u32 %v498, 7
        %v500 = vsub.s32 0, %v499
        %v501 = vrot.slane %v469, %v500
        %v502 = vmul.f32 %v501, %v486
        %v503 = vmul.f32 %v501, %v487
        %v504 = vrsqrt.pop %v496
        %v505 = vmul.f32 %v496, %v504
        %vm506 = vcmp.eq.f32.partialorder %v496, inf
        %v507 = vsel %vm506, %v496, %v505
        %vm508 = vcmp.eq.f32.partialorder %v496, 0.0
        %v509 = vand.u32 %v496, 2147483648
        %v510 = vsel %vm508, %v509, %v507
        %v511 = vrsqrt.pop %v497
        %v512 = vmul.f32 %v497, %v511
        %vm513 = vcmp.eq.f32.partialorder %v497, inf
        %v514 = vsel %vm513, %v497, %v512
        %vm515 = vcmp.eq.f32.partialorder %v497, 0.0
        %v516 = vand.u32 %v497, 2147483648
        %v517 = vsel %vm515, %v516, %v514
        %v518 = vadd.f32 %v510, 1e-06
        %v519 = vadd.f32 %v517, 1e-06
        %v520 = vrcp.pop %v518
        %v521 = vmul.f32 %v502, %v520
        %v522 = vrcp.pop %v519
        %v523 = vmul.f32 %v503, %v522
        %v524 = vlaneseq
        %v525 = vshrl.u32 %v524, 7
        %v526 = vsub.s32 1, %v525
        %v527 = vrot.slane %v469, %v526
        %v528 = vadd.f32 %v521, %v527
        %v529 = vadd.f32 %v523, %v527
        %v530 = vpack.c.bf16 %v529, %v528
        %v531 = vld [vmem:[%s436] sm:$0xf]
        %v532 = vld [vmem:[%s436 + $0x4] sm:$0xf]
        %v533 = vld [vmem:[%s436 + $0x8] sm:$0xf]
        %v534 = vld [vmem:[%s436 + $0xc] sm:$0xf]
        %v535 = vlaneseq
        %v536 = vshrl.u32 %v535, 7
        %v537 = vsub.s32 4, %v536
        %v538 = vrot.slane %v469, %v537
        %v543 = vunpack.c.l.b16 %v531
        %v544 = vunpack.c.l.b16 %v532
        %v545 = vunpack.c.l.b16 %v533
        %v546 = vunpack.c.l.b16 %v534
        %v547 = vpack.c.b16 %v544, %v543
        %v548 = vpack.c.b16 %v546, %v545
        %v552 = vsel %vm476, %v530, 0
        %554 = vmatprep.subr.bf16.mxu0 0
        %555 = vmatpush1.bf16.msra.mxu0 %v547
        %556 = vmatprep.subr.bf16.mxu0 0
        %557 = vmatpush1.bf16.msra.mxu0 %v548
        %558 = vmatprep.subr.bf16.mxu0 0
        %559 = vmatpush1.bf16.msra.mxu0 0
        %560 = vmatprep.subr.bf16.mxu0 0
        %561 = vmatpush1.bf16.msra.mxu0 0
        %562 = vmatprep.subr.bf16.mxu0 0
        %563 = vmatpush1.bf16.msra.mxu0 0
        %564 = vmatprep.subr.bf16.mxu0 0
        %565 = vmatpush1.bf16.msra.mxu0 0
        %566 = vmatprep.subr.bf16.mxu0 0
        %567 = vmatpush1.bf16.msra.mxu0 0
        %568 = vmatprep.subr.bf16.mxu0 0
        %569 = vmatpush1.bf16.msra.mxu0 0
        %570 = vmatprep.subr.bf16.mxu0 0
        %571 = vmatpush1.bf16.msra.mxu0 0
        %572 = vmatprep.subr.bf16.mxu0 0
        %573 = vmatpush1.bf16.msra.mxu0 0
        %574 = vmatprep.subr.bf16.mxu0 0
        %575 = vmatpush1.bf16.msra.mxu0 0
        %576 = vmatprep.subr.bf16.mxu0 0
        %577 = vmatpush1.bf16.msra.mxu0 0
        %578 = vmatprep.subr.bf16.mxu0 0
        %579 = vmatpush1.bf16.msra.mxu0 0
        %580 = vmatprep.subr.bf16.mxu0 0
        %581 = vmatpush1.bf16.msra.mxu0 0
        %582 = vmatprep.subr.bf16.mxu0 0
        %583 = vmatpush1.bf16.msra.mxu0 0
        %584 = vmatprep.subr.bf16.mxu0 0
        %585 = vmatpush1.bf16.msra.mxu0 0
        %586 = vmatprep.mubr.bf16.mxu0 0
        %587 = vmatmul.mubr.bf16.gmra.mrb[0].mxu0 %v552
        %v588 = vpop.f32.mrb[0].mxu0
        %v589 = vadd.f32 %v538, %v588
        %v590 = vpop.f32.mrb[0].mxu0
        %v591 = vpop.f32.mrb[0].mxu0
        %v592 = vadd.f32 %v538, %v591
        %v593 = vpop.f32.mrb[0].mxu0
        %594 = vdwg.mxu0
        %v595 = vpack.c.bf16 %v592, %v589
        %597 = vrot.lane.b32.xlu0 %v595, 120
        %v598 = vpop.permute.xlu0 %597
        %599 = vrot.lane.b32.xlu0 %v595, 112
        %v600 = vpop.permute.xlu0 %599
        %601 = vrot.lane.b32.xlu0 %v595, 104
        %v602 = vpop.permute.xlu0 %601
        %603 = vrot.lane.b32.xlu0 %v595, 96
        %v604 = vpop.permute.xlu0 %603
        %vm605 = vcmask 64512
        %v607 = vsel %vm605, %v595, 0
        %v610 = vsel %vm605, %v604, 0
        %612 = vmatprep.subr.bf16.mxu0 0
        %613 = vmatpush1.bf16.xpose.msra.mxu0 %v610
        %614 = vmatprep.subr.bf16.mxu0 0
        %615 = vmatpush1.bf16.xpose.msra.mxu0 0
        %616 = vmatprep.subr.bf16.mxu0 0
        %617 = vmatpush1.bf16.xpose.msra.mxu0 0
        %618 = vmatprep.subr.bf16.mxu0 0
        %619 = vmatpush1.bf16.xpose.msra.mxu0 0
        %620 = vmatprep.subr.bf16.mxu0 0
        %621 = vmatpush1.bf16.xpose.msra.mxu0 0
        %622 = vmatprep.subr.bf16.mxu0 0
        %623 = vmatpush1.bf16.xpose.msra.mxu0 0
        %624 = vmatprep.subr.bf16.mxu0 0
        %625 = vmatpush1.bf16.xpose.msra.mxu0 0
        %626 = vmatprep.subr.bf16.mxu0 0
        %627 = vmatpush1.bf16.xpose.msra.mxu0 0
        %628 = vmatprep.subr.bf16.mxu0 0
        %629 = vmatpush1.bf16.xpose.msra.mxu0 0
        %630 = vmatprep.subr.bf16.mxu0 0
        %631 = vmatpush1.bf16.xpose.msra.mxu0 0
        %632 = vmatprep.subr.bf16.mxu0 0
        %633 = vmatpush1.bf16.xpose.msra.mxu0 0
        %634 = vmatprep.subr.bf16.mxu0 0
        %635 = vmatpush1.bf16.xpose.msra.mxu0 0
        %636 = vmatprep.subr.bf16.mxu0 0
        %637 = vmatpush1.bf16.xpose.msra.mxu0 0
        %638 = vmatprep.subr.bf16.mxu0 0
        %639 = vmatpush1.bf16.xpose.msra.mxu0 0
        %640 = vmatprep.subr.bf16.mxu0 0
        %641 = vmatpush1.bf16.xpose.msra.mxu0 0
        %642 = vmatprep.subr.bf16.mxu0 0
        %643 = vmatpush1.bf16.xpose.msra.mxu0 0
        %644 = vmatprep.mubr.bf16.mxu0 0
        %645 = vmatmul.mubr.bf16.gmra.mrb[0].mxu0 %v607
        %v646 = vpop.f32.mrb[0].mxu0
        %v647 = vadd.f32 0.0, %v646
        %v648 = vpop.f32.mrb[0].mxu0
        %v649 = vpop.f32.mrb[0].mxu0
        %v650 = vpop.f32.mrb[0].mxu0
        %651 = vdwg.mxu0
        %652 = vrot.lane.b32.xlu0 %v598, 96
        %v653 = vpop.permute.xlu0 %652
        %v655 = vsel %vm605, %v598, 0
        %v658 = vsel %vm605, %v653, 0
        %660 = vmatprep.subr.bf16.mxu0 0
        %661 = vmatpush1.bf16.xpose.msra.mxu0 %v658
        %662 = vmatprep.subr.bf16.mxu0 0
        %663 = vmatpush1.bf16.xpose.msra.mxu0 0
        %664 = vmatprep.subr.bf16.mxu0 0
        %665 = vmatpush1.bf16.xpose.msra.mxu0 0
        %666 = vmatprep.subr.bf16.mxu0 0
        %667 = vmatpush1.bf16.xpose.msra.mxu0 0
        %668 = vmatprep.subr.bf16.mxu0 0
        %669 = vmatpush1.bf16.xpose.msra.mxu0 0
        %670 = vmatprep.subr.bf16.mxu0 0
        %671 = vmatpush1.bf16.xpose.msra.mxu0 0
        %672 = vmatprep.subr.bf16.mxu0 0
        %673 = vmatpush1.bf16.xpose.msra.mxu0 0
        %674 = vmatprep.subr.bf16.mxu0 0
        %675 = vmatpush1.bf16.xpose.msra.mxu0 0
        %676 = vmatprep.subr.bf16.mxu0 0
        %677 = vmatpush1.bf16.xpose.msra.mxu0 0
        %678 = vmatprep.subr.bf16.mxu0 0
        %679 = vmatpush1.bf16.xpose.msra.mxu0 0
        %680 = vmatprep.subr.bf16.mxu0 0
        %681 = vmatpush1.bf16.xpose.msra.mxu0 0
        %682 = vmatprep.subr.bf16.mxu0 0
        %683 = vmatpush1.bf16.xpose.msra.mxu0 0
        %684 = vmatprep.subr.bf16.mxu0 0
        %685 = vmatpush1.bf16.xpose.msra.mxu0 0
        %686 = vmatprep.subr.bf16.mxu0 0
        %687 = vmatpush1.bf16.xpose.msra.mxu0 0
        %688 = vmatprep.subr.bf16.mxu0 0
        %689 = vmatpush1.bf16.xpose.msra.mxu0 0
        %690 = vmatprep.subr.bf16.mxu0 0
        %691 = vmatpush1.bf16.xpose.msra.mxu0 0
        %692 = vmatprep.mubr.bf16.mxu0 0
        %693 = vmatmul.mubr.bf16.gmra.mrb[0].mxu0 %v655
        %v694 = vpop.f32.mrb[0].mxu0
        %v695 = vadd.f32 0.0, %v694
        %v696 = vpop.f32.mrb[0].mxu0
        %v697 = vpop.f32.mrb[0].mxu0
        %v698 = vpop.f32.mrb[0].mxu0
        %699 = vdwg.mxu0
        %700 = vrot.lane.b32.xlu0 %v600, 96
        %v701 = vpop.permute.xlu0 %700
        %v703 = vsel %vm605, %v600, 0
        %v706 = vsel %vm605, %v701, 0
        %708 = vmatprep.subr.bf16.mxu0 0
        %709 = vmatpush1.bf16.xpose.msra.mxu0 %v706
        %710 = vmatprep.subr.bf16.mxu0 0
        %711 = vmatpush1.bf16.xpose.msra.mxu0 0
        %712 = vmatprep.subr.bf16.mxu0 0
        %713 = vmatpush1.bf16.xpose.msra.mxu0 0
        %714 = vmatprep.subr.bf16.mxu0 0
        %715 = vmatpush1.bf16.xpose.msra.mxu0 0
        %716 = vmatprep.subr.bf16.mxu0 0
        %717 = vmatpush1.bf16.xpose.msra.mxu0 0
        %718 = vmatprep.subr.bf16.mxu0 0
        %719 = vmatpush1.bf16.xpose.msra.mxu0 0
        %720 = vmatprep.subr.bf16.mxu0 0
        %721 = vmatpush1.bf16.xpose.msra.mxu0 0
        %722 = vmatprep.subr.bf16.mxu0 0
        %723 = vmatpush1.bf16.xpose.msra.mxu0 0
        %724 = vmatprep.subr.bf16.mxu0 0
        %725 = vmatpush1.bf16.xpose.msra.mxu0 0
        %726 = vmatprep.subr.bf16.mxu0 0
        %727 = vmatpush1.bf16.xpose.msra.mxu0 0
        %728 = vmatprep.subr.bf16.mxu0 0
        %729 = vmatpush1.bf16.xpose.msra.mxu0 0
        %730 = vmatprep.subr.bf16.mxu0 0
        %731 = vmatpush1.bf16.xpose.msra.mxu0 0
        %732 = vmatprep.subr.bf16.mxu0 0
        %733 = vmatpush1.bf16.xpose.msra.mxu0 0
        %734 = vmatprep.subr.bf16.mxu0 0
        %735 = vmatpush1.bf16.xpose.msra.mxu0 0
        %736 = vmatprep.subr.bf16.mxu0 0
        %737 = vmatpush1.bf16.xpose.msra.mxu0 0
        %738 = vmatprep.subr.bf16.mxu0 0
        %739 = vmatpush1.bf16.xpose.msra.mxu0 0
        %740 = vmatprep.mubr.bf16.mxu0 0
        %741 = vmatmul.mubr.bf16.gmra.mrb[0].mxu0 %v703
        %v742 = vpop.f32.mrb[0].mxu0
        %v743 = vadd.f32 0.0, %v742
        %v744 = vpop.f32.mrb[0].mxu0
        %v745 = vpop.f32.mrb[0].mxu0
        %v746 = vpop.f32.mrb[0].mxu0
        %747 = vdwg.mxu0
        %748 = vrot.lane.b32.xlu0 %v602, 96
        %v749 = vpop.permute.xlu0 %748
        %v751 = vsel %vm605, %v602, 0
        %v754 = vsel %vm605, %v749, 0
        %756 = vmatprep.subr.bf16.mxu0 0
        %757 = vmatpush1.bf16.xpose.msra.mxu0 %v754
        %758 = vmatprep.subr.bf16.mxu0 0
        %759 = vmatpush1.bf16.xpose.msra.mxu0 0
        %760 = vmatprep.subr.bf16.mxu0 0
        %761 = vmatpush1.bf16.xpose.msra.mxu0 0
        %762 = vmatprep.subr.bf16.mxu0 0
        %763 = vmatpush1.bf16.xpose.msra.mxu0 0
        %764 = vmatprep.subr.bf16.mxu0 0
        %765 = vmatpush1.bf16.xpose.msra.mxu0 0
        %766 = vmatprep.subr.bf16.mxu0 0
        %767 = vmatpush1.bf16.xpose.msra.mxu0 0
        %768 = vmatprep.subr.bf16.mxu0 0
        %769 = vmatpush1.bf16.xpose.msra.mxu0 0
        %770 = vmatprep.subr.bf16.mxu0 0
        %771 = vmatpush1.bf16.xpose.msra.mxu0 0
        %772 = vmatprep.subr.bf16.mxu0 0
        %773 = vmatpush1.bf16.xpose.msra.mxu0 0
        %774 = vmatprep.subr.bf16.mxu0 0
        %775 = vmatpush1.bf16.xpose.msra.mxu0 0
        %776 = vmatprep.subr.bf16.mxu0 0
        %777 = vmatpush1.bf16.xpose.msra.mxu0 0
        %778 = vmatprep.subr.bf16.mxu0 0
        %779 = vmatpush1.bf16.xpose.msra.mxu0 0
        %780 = vmatprep.subr.bf16.mxu0 0
        %781 = vmatpush1.bf16.xpose.msra.mxu0 0
        %782 = vmatprep.subr.bf16.mxu0 0
        %783 = vmatpush1.bf16.xpose.msra.mxu0 0
        %784 = vmatprep.subr.bf16.mxu0 0
        %785 = vmatpush1.bf16.xpose.msra.mxu0 0
        %786 = vmatprep.subr.bf16.mxu0 0
        %787 = vmatpush1.bf16.xpose.msra.mxu0 0
        %788 = vmatprep.mubr.bf16.mxu0 0
        %789 = vmatmul.mubr.bf16.gmra.mrb[0].mxu0 %v751
        %v790 = vpop.f32.mrb[0].mxu0
        %v791 = vadd.f32 0.0, %v790
        %v792 = vpop.f32.mrb[0].mxu0
        %v793 = vpop.f32.mrb[0].mxu0
        %v794 = vpop.f32.mrb[0].mxu0
        %795 = vdwg.mxu0
        %v796 = vmul.f32 %v647, 0.35355338
        %v797 = vmul.f32 %v695, 0.35355338
        %v798 = vmul.f32 %v743, 0.35355338
        %v799 = vmul.f32 %v791, 0.35355338
        %v801 = vlaneseq
        %v802 = vshrl.u32 %v801, 7
        %v803 = vsub.s32 0, %v802
        %v804 = vrot.slane %v474, %v803
        %v806 = vadd.f32 %v796, %v804
        %v807 = vadd.f32 %v797, %v804
        %v808 = vadd.f32 %v798, %v804
        %v809 = vadd.f32 %v799, %v804
        %v810 = vsel %vm605, %v806, -inf
        %811 = vmax.xlane.f32.xlu0 %v810
        %v812 = vpop.xlane.xlu0 %811
        %v813 = vsel %vm605, %v807, -inf
        %814 = vmax.xlane.f32.xlu0 %v813
        %v815 = vpop.xlane.xlu0 %814
        %v816 = vsel %vm605, %v808, -inf
        %817 = vmax.xlane.f32.xlu0 %v816
        %v818 = vpop.xlane.xlu0 %817
        %v819 = vsel %vm605, %v809, -inf
        %820 = vmax.xlane.f32.xlu0 %v819
        %v821 = vpop.xlane.xlu0 %820
        %v822 = vsub.f32 %v806, %v812
        %v823 = vsub.f32 %v807, %v815
        %v824 = vsub.f32 %v808, %v818
        %v825 = vsub.f32 %v809, %v821
        %v826 = vmul.f32 %v822, 1.442695
        %v827 = vpow.pop %v826
        %v828 = vmul.f32 %v823, 1.442695
        %v829 = vpow.pop %v828
        %v830 = vmul.f32 %v824, 1.442695
        %v831 = vpow.pop %v830
        %v832 = vmul.f32 %v825, 1.442695
        %v833 = vpow.pop %v832
        %v834 = vsel %vm605, %v827, 0.0
        %835 = vadd.xlane.f32.xlu0 %v834
        %v836 = vpop.xlane.xlu0 %835
        %v837 = vsel %vm605, %v829, 0.0
        %838 = vadd.xlane.f32.xlu0 %v837
        %v839 = vpop.xlane.xlu0 %838
        %v840 = vsel %vm605, %v831, 0.0
        %841 = vadd.xlane.f32.xlu0 %v840
        %v842 = vpop.xlane.xlu0 %841
        %v843 = vsel %vm605, %v833, 0.0
        %844 = vadd.xlane.f32.xlu0 %v843
        %v845 = vpop.xlane.xlu0 %844
        %v846 = vrcp.pop %v836
        %v847 = vrcp.pop %v839
        %v848 = vrcp.pop %v842
        %v849 = vrcp.pop %v845
        %v850 = vmul.f32 %v827, %v846
        %v851 = vmul.f32 %v829, %v847
        %v852 = vmul.f32 %v831, %v848
        %v853 = vmul.f32 %v833, %v849
        %v854 = vpack.c.bf16 %v850, %v850
        %v855 = vpack.c.bf16 %v851, %v851
        %v856 = vpack.c.bf16 %v852, %v852
        %v857 = vpack.c.bf16 %v853, %v853
        %858 = vrot.lane.b32.xlu0 %v595, 64
        %v859 = vpop.permute.xlu0 %858
        %v861 = vsel %vm605, %v854, 0
        %vm863 = vcmask 1043456
        %v865 = vsel %vm863, %v859, 0
        %867 = vmatprep.subr.bf16.mxu0 0
        %868 = vmatpush1.bf16.msra.mxu0 %v865
        %869 = vmatprep.subr.bf16.mxu0 0
        %870 = vmatpush1.bf16.msra.mxu0 0
        %871 = vmatprep.subr.bf16.mxu0 0
        %872 = vmatpush1.bf16.msra.mxu0 0
        %873 = vmatprep.subr.bf16.mxu0 0
        %874 = vmatpush1.bf16.msra.mxu0 0
        %875 = vmatprep.subr.bf16.mxu0 0
        %876 = vmatpush1.bf16.msra.mxu0 0
        %877 = vmatprep.subr.bf16.mxu0 0
        %878 = vmatpush1.bf16.msra.mxu0 0
        %879 = vmatprep.subr.bf16.mxu0 0
        %880 = vmatpush1.bf16.msra.mxu0 0
        %881 = vmatprep.subr.bf16.mxu0 0
        %882 = vmatpush1.bf16.msra.mxu0 0
        %883 = vmatprep.subr.bf16.mxu0 0
        %884 = vmatpush1.bf16.msra.mxu0 0
        %885 = vmatprep.subr.bf16.mxu0 0
        %886 = vmatpush1.bf16.msra.mxu0 0
        %887 = vmatprep.subr.bf16.mxu0 0
        %888 = vmatpush1.bf16.msra.mxu0 0
        %889 = vmatprep.subr.bf16.mxu0 0
        %890 = vmatpush1.bf16.msra.mxu0 0
        %891 = vmatprep.subr.bf16.mxu0 0
        %892 = vmatpush1.bf16.msra.mxu0 0
        %893 = vmatprep.subr.bf16.mxu0 0
        %894 = vmatpush1.bf16.msra.mxu0 0
        %895 = vmatprep.subr.bf16.mxu0 0
        %896 = vmatpush1.bf16.msra.mxu0 0
        %897 = vmatprep.subr.bf16.mxu0 0
        %898 = vmatpush1.bf16.msra.mxu0 0
        %899 = vmatprep.mubr.bf16.mxu0 0
        %900 = vmatmul.mubr.bf16.gmra.mrb[0].mxu0 %v861
        %v901 = vpop.f32.mrb[0].mxu0
        %v902 = vadd.f32 0.0, %v901
        %v903 = vpop.f32.mrb[0].mxu0
        %v904 = vpop.f32.mrb[0].mxu0
        %v905 = vpop.f32.mrb[0].mxu0
        %906 = vdwg.mxu0
        %907 = vrot.lane.b32.xlu0 %v598, 64
        %v908 = vpop.permute.xlu0 %907
        %v910 = vsel %vm605, %v855, 0
        %v913 = vsel %vm863, %v908, 0
        %915 = vmatprep.subr.bf16.mxu0 0
        %916 = vmatpush1.bf16.msra.mxu0 %v913
        %917 = vmatprep.subr.bf16.mxu0 0
        %918 = vmatpush1.bf16.msra.mxu0 0
        %919 = vmatprep.subr.bf16.mxu0 0
        %920 = vmatpush1.bf16.msra.mxu0 0
        %921 = vmatprep.subr.bf16.mxu0 0
        %922 = vmatpush1.bf16.msra.mxu0 0
        %923 = vmatprep.subr.bf16.mxu0 0
        %924 = vmatpush1.bf16.msra.mxu0 0
        %925 = vmatprep.subr.bf16.mxu0 0
        %926 = vmatpush1.bf16.msra.mxu0 0
        %927 = vmatprep.subr.bf16.mxu0 0
        %928 = vmatpush1.bf16.msra.mxu0 0
        %929 = vmatprep.subr.bf16.mxu0 0
        %930 = vmatpush1.bf16.msra.mxu0 0
        %931 = vmatprep.subr.bf16.mxu0 0
        %932 = vmatpush1.bf16.msra.mxu0 0
        %933 = vmatprep.subr.bf16.mxu0 0
        %934 = vmatpush1.bf16.msra.mxu0 0
        %935 = vmatprep.subr.bf16.mxu0 0
        %936 = vmatpush1.bf16.msra.mxu0 0
        %937 = vmatprep.subr.bf16.mxu0 0
        %938 = vmatpush1.bf16.msra.mxu0 0
        %939 = vmatprep.subr.bf16.mxu0 0
        %940 = vmatpush1.bf16.msra.mxu0 0
        %941 = vmatprep.subr.bf16.mxu0 0
        %942 = vmatpush1.bf16.msra.mxu0 0
        %943 = vmatprep.subr.bf16.mxu0 0
        %944 = vmatpush1.bf16.msra.mxu0 0
        %945 = vmatprep.subr.bf16.mxu0 0
        %946 = vmatpush1.bf16.msra.mxu0 0
        %947 = vmatprep.mubr.bf16.mxu0 0
        %948 = vmatmul.mubr.bf16.gmra.mrb[0].mxu0 %v910
        %v949 = vpop.f32.mrb[0].mxu0
        %v950 = vadd.f32 0.0, %v949
        %v951 = vpop.f32.mrb[0].mxu0
        %v952 = vpop.f32.mrb[0].mxu0
        %v953 = vpop.f32.mrb[0].mxu0
        %954 = vdwg.mxu0
        %955 = vrot.lane.b32.xlu0 %v600, 64
        %v956 = vpop.permute.xlu0 %955
        %v958 = vsel %vm605, %v856, 0
        %v961 = vsel %vm863, %v956, 0
        %963 = vmatprep.subr.bf16.mxu0 0
        %964 = vmatpush1.bf16.msra.mxu0 %v961
        %965 = vmatprep.subr.bf16.mxu0 0
        %966 = vmatpush1.bf16.msra.mxu0 0
        %967 = vmatprep.subr.bf16.mxu0 0
        %968 = vmatpush1.bf16.msra.mxu0 0
        %969 = vmatprep.subr.bf16.mxu0 0
        %970 = vmatpush1.bf16.msra.mxu0 0
        %971 = vmatprep.subr.bf16.mxu0 0
        %972 = vmatpush1.bf16.msra.mxu0 0
        %973 = vmatprep.subr.bf16.mxu0 0
        %974 = vmatpush1.bf16.msra.mxu0 0
        %975 = vmatprep.subr.bf16.mxu0 0
        %976 = vmatpush1.bf16.msra.mxu0 0
        %977 = vmatprep.subr.bf16.mxu0 0
        %978 = vmatpush1.bf16.msra.mxu0 0
        %979 = vmatprep.subr.bf16.mxu0 0
        %980 = vmatpush1.bf16.msra.mxu0 0
        %981 = vmatprep.subr.bf16.mxu0 0
        %982 = vmatpush1.bf16.msra.mxu0 0
        %983 = vmatprep.subr.bf16.mxu0 0
        %984 = vmatpush1.bf16.msra.mxu0 0
        %985 = vmatprep.subr.bf16.mxu0 0
        %986 = vmatpush1.bf16.msra.mxu0 0
        %987 = vmatprep.subr.bf16.mxu0 0
        %988 = vmatpush1.bf16.msra.mxu0 0
        %989 = vmatprep.subr.bf16.mxu0 0
        %990 = vmatpush1.bf16.msra.mxu0 0
        %991 = vmatprep.subr.bf16.mxu0 0
        %992 = vmatpush1.bf16.msra.mxu0 0
        %993 = vmatprep.subr.bf16.mxu0 0
        %994 = vmatpush1.bf16.msra.mxu0 0
        %995 = vmatprep.mubr.bf16.mxu0 0
        %996 = vmatmul.mubr.bf16.gmra.mrb[0].mxu0 %v958
        %v997 = vpop.f32.mrb[0].mxu0
        %v998 = vadd.f32 0.0, %v997
        %v999 = vpop.f32.mrb[0].mxu0
        %v1000 = vpop.f32.mrb[0].mxu0
        %v1001 = vpop.f32.mrb[0].mxu0
        %1002 = vdwg.mxu0
        %1003 = vrot.lane.b32.xlu0 %v602, 64
        %v1004 = vpop.permute.xlu0 %1003
        %v1006 = vsel %vm605, %v857, 0
        %v1009 = vsel %vm863, %v1004, 0
        %1011 = vmatprep.subr.bf16.mxu0 0
        %1012 = vmatpush1.bf16.msra.mxu0 %v1009
        %1013 = vmatprep.subr.bf16.mxu0 0
        %1014 = vmatpush1.bf16.msra.mxu0 0
        %1015 = vmatprep.subr.bf16.mxu0 0
        %1016 = vmatpush1.bf16.msra.mxu0 0
        %1017 = vmatprep.subr.bf16.mxu0 0
        %1018 = vmatpush1.bf16.msra.mxu0 0
        %1019 = vmatprep.subr.bf16.mxu0 0
        %1020 = vmatpush1.bf16.msra.mxu0 0
        %1021 = vmatprep.subr.bf16.mxu0 0
        %1022 = vmatpush1.bf16.msra.mxu0 0
        %1023 = vmatprep.subr.bf16.mxu0 0
        %1024 = vmatpush1.bf16.msra.mxu0 0
        %1025 = vmatprep.subr.bf16.mxu0 0
        %1026 = vmatpush1.bf16.msra.mxu0 0
        %1027 = vmatprep.subr.bf16.mxu0 0
        %1028 = vmatpush1.bf16.msra.mxu0 0
        %1029 = vmatprep.subr.bf16.mxu0 0
        %1030 = vmatpush1.bf16.msra.mxu0 0
        %1031 = vmatprep.subr.bf16.mxu0 0
        %1032 = vmatpush1.bf16.msra.mxu0 0
        %1033 = vmatprep.subr.bf16.mxu0 0
        %1034 = vmatpush1.bf16.msra.mxu0 0
        %1035 = vmatprep.subr.bf16.mxu0 0
        %1036 = vmatpush1.bf16.msra.mxu0 0
        %1037 = vmatprep.subr.bf16.mxu0 0
        %1038 = vmatpush1.bf16.msra.mxu0 0
        %1039 = vmatprep.subr.bf16.mxu0 0
        %1040 = vmatpush1.bf16.msra.mxu0 0
        %1041 = vmatprep.subr.bf16.mxu0 0
        %1042 = vmatpush1.bf16.msra.mxu0 0
        %1043 = vmatprep.mubr.bf16.mxu0 0
        %1044 = vmatmul.mubr.bf16.gmra.mrb[0].mxu0 %v1006
        %v1045 = vpop.f32.mrb[0].mxu0
        %v1046 = vadd.f32 0.0, %v1045
        %v1047 = vpop.f32.mrb[0].mxu0
        %v1048 = vpop.f32.mrb[0].mxu0
        %v1049 = vpop.f32.mrb[0].mxu0
        %1050 = vdwg.mxu0
        %1052 = vrot.lane.b32.xlu0 %v950, 8
        %v1053 = vpop.permute.xlu0 %1052
        %1056 = vrot.lane.b32.xlu0 %v998, 16
        %v1057 = vpop.permute.xlu0 %1056
        %1060 = vrot.lane.b32.xlu0 %v1046, 24
        %v1061 = vpop.permute.xlu0 %1060
        %v1063 = vsel %vm605, %v902, %v1053
        %vm1064 = vcmask 130048
        %v1065 = vsel %vm1064, %v1063, %v1057
        %vm1066 = vcmask 195584
        %v1067 = vsel %vm1066, %v1065, %v1061
        %v1068 = vrot.slane %v595, 4
        %1069 = vrot.lane.b32.xlu0 %v1068, 96
        %v1070 = vpop.permute.xlu0 %1069
        %v1072 = vsel %vm605, %v1068, 0
        %v1075 = vsel %vm605, %v1070, 0
        %1077 = vmatprep.subr.bf16.mxu0 0
        %1078 = vmatpush1.bf16.xpose.msra.mxu0 %v1075
        %1079 = vmatprep.subr.bf16.mxu0 0
        %1080 = vmatpush1.bf16.xpose.msra.mxu0 0
        %1081 = vmatprep.subr.bf16.mxu0 0
        %1082 = vmatpush1.bf16.xpose.msra.mxu0 0
        %1083 = vmatprep.subr.bf16.mxu0 0
        %1084 = vmatpush1.bf16.xpose.msra.mxu0 0
        %1085 = vmatprep.subr.bf16.mxu0 0
        %1086 = vmatpush1.bf16.xpose.msra.mxu0 0
        %1087 = vmatprep.subr.bf16.mxu0 0
        %1088 = vmatpush1.bf16.xpose.msra.mxu0 0
        %1089 = vmatprep.subr.bf16.mxu0 0
        %1090 = vmatpush1.bf16.xpose.msra.mxu0 0
        %1091 = vmatprep.subr.bf16.mxu0 0
        %1092 = vmatpush1.bf16.xpose.msra.mxu0 0
        %1093 = vmatprep.subr.bf16.mxu0 0
        %1094 = vmatpush1.bf16.xpose.msra.mxu0 0
        %1095 = vmatprep.subr.bf16.mxu0 0
        %1096 = vmatpush1.bf16.xpose.msra.mxu0 0
        %1097 = vmatprep.subr.bf16.mxu0 0
        %1098 = vmatpush1.bf16.xpose.msra.mxu0 0
        %1099 = vmatprep.subr.bf16.mxu0 0
        %1100 = vmatpush1.bf16.xpose.msra.mxu0 0
        %1101 = vmatprep.subr.bf16.mxu0 0
        %1102 = vmatpush1.bf16.xpose.msra.mxu0 0
        %1103 = vmatprep.subr.bf16.mxu0 0
        %1104 = vmatpush1.bf16.xpose.msra.mxu0 0
        %1105 = vmatprep.subr.bf16.mxu0 0
        %1106 = vmatpush1.bf16.xpose.msra.mxu0 0
        %1107 = vmatprep.subr.bf16.mxu0 0
        %1108 = vmatpush1.bf16.xpose.msra.mxu0 0
        %1109 = vmatprep.mubr.bf16.mxu0 0
        %1110 = vmatmul.mubr.bf16.gmra.mrb[0].mxu0 %v1072
        %v1111 = vpop.f32.mrb[0].mxu0
        %v1112 = vadd.f32 0.0, %v1111
        %v1113 = vpop.f32.mrb[0].mxu0
        %v1114 = vpop.f32.mrb[0].mxu0
        %v1115 = vpop.f32.mrb[0].mxu0
        %1116 = vdwg.mxu0
        %v1117 = vrot.slane %v598, 4
        %1118 = vrot.lane.b32.xlu0 %v1117, 96
        %v1119 = vpop.permute.xlu0 %1118
        %v1121 = vsel %vm605, %v1117, 0
        %v1124 = vsel %vm605, %v1119, 0
        %1126 = vmatprep.subr.bf16.mxu0 0
        %1127 = vmatpush1.bf16.xpose.msra.mxu0 %v1124
        %1128 = vmatprep.subr.bf16.mxu0 0
        %1129 = vmatpush1.bf16.xpose.msra.mxu0 0
        %1130 = vmatprep.subr.bf16.mxu0 0
        %1131 = vmatpush1.bf16.xpose.msra.mxu0 0
        %1132 = vmatprep.subr.bf16.mxu0 0
        %1133 = vmatpush1.bf16.xpose.msra.mxu0 0
        %1134 = vmatprep.subr.bf16.mxu0 0
        %1135 = vmatpush1.bf16.xpose.msra.mxu0 0
        %1136 = vmatprep.subr.bf16.mxu0 0
        %1137 = vmatpush1.bf16.xpose.msra.mxu0 0
        %1138 = vmatprep.subr.bf16.mxu0 0
        %1139 = vmatpush1.bf16.xpose.msra.mxu0 0
        %1140 = vmatprep.subr.bf16.mxu0 0
        %1141 = vmatpush1.bf16.xpose.msra.mxu0 0
        %1142 = vmatprep.subr.bf16.mxu0 0
        %1143 = vmatpush1.bf16.xpose.msra.mxu0 0
        %1144 = vmatprep.subr.bf16.mxu0 0
        %1145 = vmatpush1.bf16.xpose.msra.mxu0 0
        %1146 = vmatprep.subr.bf16.mxu0 0
        %1147 = vmatpush1.bf16.xpose.msra.mxu0 0
        %1148 = vmatprep.subr.bf16.mxu0 0
        %1149 = vmatpush1.bf16.xpose.msra.mxu0 0
        %1150 = vmatprep.subr.bf16.mxu0 0
        %1151 = vmatpush1.bf16.xpose.msra.mxu0 0
        %1152 = vmatprep.subr.bf16.mxu0 0
        %1153 = vmatpush1.bf16.xpose.msra.mxu0 0
        %1154 = vmatprep.subr.bf16.mxu0 0
        %1155 = vmatpush1.bf16.xpose.msra.mxu0 0
        %1156 = vmatprep.subr.bf16.mxu0 0
        %1157 = vmatpush1.bf16.xpose.msra.mxu0 0
        %1158 = vmatprep.mubr.bf16.mxu0 0
        %1159 = vmatmul.mubr.bf16.gmra.mrb[0].mxu0 %v1121
        %v1160 = vpop.f32.mrb[0].mxu0
        %v1161 = vadd.f32 0.0, %v1160
        %v1162 = vpop.f32.mrb[0].mxu0
        %v1163 = vpop.f32.mrb[0].mxu0
        %v1164 = vpop.f32.mrb[0].mxu0
        %1165 = vdwg.mxu0
        %v1166 = vrot.slane %v600, 4
        %1167 = vrot.lane.b32.xlu0 %v1166, 96
        %v1168 = vpop.permute.xlu0 %1167
        %v1170 = vsel %vm605, %v1166, 0
        %v1173 = vsel %vm605, %v1168, 0
        %1175 = vmatprep.subr.bf16.mxu0 0
        %1176 = vmatpush1.bf16.xpose.msra.mxu0 %v1173
        %1177 = vmatprep.subr.bf16.mxu0 0
        %1178 = vmatpush1.bf16.xpose.msra.mxu0 0
        %1179 = vmatprep.subr.bf16.mxu0 0
        %1180 = vmatpush1.bf16.xpose.msra.mxu0 0
        %1181 = vmatprep.subr.bf16.mxu0 0
        %1182 = vmatpush1.bf16.xpose.msra.mxu0 0
        %1183 = vmatprep.subr.bf16.mxu0 0
        %1184 = vmatpush1.bf16.xpose.msra.mxu0 0
        %1185 = vmatprep.subr.bf16.mxu0 0
        %1186 = vmatpush1.bf16.xpose.msra.mxu0 0
        %1187 = vmatprep.subr.bf16.mxu0 0
        %1188 = vmatpush1.bf16.xpose.msra.mxu0 0
        %1189 = vmatprep.subr.bf16.mxu0 0
        %1190 = vmatpush1.bf16.xpose.msra.mxu0 0
        %1191 = vmatprep.subr.bf16.mxu0 0
        %1192 = vmatpush1.bf16.xpose.msra.mxu0 0
        %1193 = vmatprep.subr.bf16.mxu0 0
        %1194 = vmatpush1.bf16.xpose.msra.mxu0 0
        %1195 = vmatprep.subr.bf16.mxu0 0
        %1196 = vmatpush1.bf16.xpose.msra.mxu0 0
        %1197 = vmatprep.subr.bf16.mxu0 0
        %1198 = vmatpush1.bf16.xpose.msra.mxu0 0
        %1199 = vmatprep.subr.bf16.mxu0 0
        %1200 = vmatpush1.bf16.xpose.msra.mxu0 0
        %1201 = vmatprep.subr.bf16.mxu0 0
        %1202 = vmatpush1.bf16.xpose.msra.mxu0 0
        %1203 = vmatprep.subr.bf16.mxu0 0
        %1204 = vmatpush1.bf16.xpose.msra.mxu0 0
        %1205 = vmatprep.subr.bf16.mxu0 0
        %1206 = vmatpush1.bf16.xpose.msra.mxu0 0
        %1207 = vmatprep.mubr.bf16.mxu0 0
        %1208 = vmatmul.mubr.bf16.gmra.mrb[0].mxu0 %v1170
        %v1209 = vpop.f32.mrb[0].mxu0
        %v1210 = vadd.f32 0.0, %v1209
        %v1211 = vpop.f32.mrb[0].mxu0
        %v1212 = vpop.f32.mrb[0].mxu0
        %v1213 = vpop.f32.mrb[0].mxu0
        %1214 = vdwg.mxu0
        %v1215 = vrot.slane %v602, 4
        %1216 = vrot.lane.b32.xlu0 %v1215, 96
        %v1217 = vpop.permute.xlu0 %1216
        %v1219 = vsel %vm605, %v1215, 0
        %v1222 = vsel %vm605, %v1217, 0
        %1224 = vmatprep.subr.bf16.mxu0 0
        %1225 = vmatpush1.bf16.xpose.msra.mxu0 %v1222
        %1226 = vmatprep.subr.bf16.mxu0 0
        %1227 = vmatpush1.bf16.xpose.msra.mxu0 0
        %1228 = vmatprep.subr.bf16.mxu0 0
        %1229 = vmatpush1.bf16.xpose.msra.mxu0 0
        %1230 = vmatprep.subr.bf16.mxu0 0
        %1231 = vmatpush1.bf16.xpose.msra.mxu0 0
        %1232 = vmatprep.subr.bf16.mxu0 0
        %1233 = vmatpush1.bf16.xpose.msra.mxu0 0
        %1234 = vmatprep.subr.bf16.mxu0 0
        %1235 = vmatpush1.bf16.xpose.msra.mxu0 0
        %1236 = vmatprep.subr.bf16.mxu0 0
        %1237 = vmatpush1.bf16.xpose.msra.mxu0 0
        %1238 = vmatprep.subr.bf16.mxu0 0
        %1239 = vmatpush1.bf16.xpose.msra.mxu0 0
        %1240 = vmatprep.subr.bf16.mxu0 0
        %1241 = vmatpush1.bf16.xpose.msra.mxu0 0
        %1242 = vmatprep.subr.bf16.mxu0 0
        %1243 = vmatpush1.bf16.xpose.msra.mxu0 0
        %1244 = vmatprep.subr.bf16.mxu0 0
        %1245 = vmatpush1.bf16.xpose.msra.mxu0 0
        %1246 = vmatprep.subr.bf16.mxu0 0
        %1247 = vmatpush1.bf16.xpose.msra.mxu0 0
        %1248 = vmatprep.subr.bf16.mxu0 0
        %1249 = vmatpush1.bf16.xpose.msra.mxu0 0
        %1250 = vmatprep.subr.bf16.mxu0 0
        %1251 = vmatpush1.bf16.xpose.msra.mxu0 0
        %1252 = vmatprep.subr.bf16.mxu0 0
        %1253 = vmatpush1.bf16.xpose.msra.mxu0 0
        %1254 = vmatprep.subr.bf16.mxu0 0
        %1255 = vmatpush1.bf16.xpose.msra.mxu0 0
        %1256 = vmatprep.mubr.bf16.mxu0 0
        %1257 = vmatmul.mubr.bf16.gmra.mrb[0].mxu0 %v1219
        %v1258 = vpop.f32.mrb[0].mxu0
        %v1259 = vadd.f32 0.0, %v1258
        %v1260 = vpop.f32.mrb[0].mxu0
        %v1261 = vpop.f32.mrb[0].mxu0
        %v1262 = vpop.f32.mrb[0].mxu0
        %1263 = vdwg.mxu0
        %v1264 = vmul.f32 %v1112, 0.35355338
        %v1265 = vmul.f32 %v1161, 0.35355338
        %v1266 = vmul.f32 %v1210, 0.35355338
        %v1267 = vmul.f32 %v1259, 0.35355338
        %v1269 = vlaneseq
        %v1270 = vshrl.u32 %v1269, 7
        %v1271 = vsub.s32 0, %v1270
        %v1272 = vrot.slane %v475, %v1271
        %v1274 = vadd.f32 %v1264, %v1272
        %v1275 = vadd.f32 %v1265, %v1272
        %v1276 = vadd.f32 %v1266, %v1272
        %v1277 = vadd.f32 %v1267, %v1272
        %v1278 = vsel %vm605, %v1274, -inf
        %1279 = vmax.xlane.f32.xlu0 %v1278
        %v1280 = vpop.xlane.xlu0 %1279
        %v1281 = vsel %vm605, %v1275, -inf
        %1282 = vmax.xlane.f32.xlu0 %v1281
        %v1283 = vpop.xlane.xlu0 %1282
        %v1284 = vsel %vm605, %v1276, -inf
        %1285 = vmax.xlane.f32.xlu0 %v1284
        %v1286 = vpop.xlane.xlu0 %1285
        %v1287 = vsel %vm605, %v1277, -inf
        %1288 = vmax.xlane.f32.xlu0 %v1287
        %v1289 = vpop.xlane.xlu0 %1288
        %v1290 = vsub.f32 %v1274, %v1280
        %v1291 = vsub.f32 %v1275, %v1283
        %v1292 = vsub.f32 %v1276, %v1286
        %v1293 = vsub.f32 %v1277, %v1289
        %v1294 = vmul.f32 %v1290, 1.442695
        %v1295 = vpow.pop %v1294
        %v1296 = vmul.f32 %v1291, 1.442695
        %v1297 = vpow.pop %v1296
        %v1298 = vmul.f32 %v1292, 1.442695
        %v1299 = vpow.pop %v1298
        %v1300 = vmul.f32 %v1293, 1.442695
        %v1301 = vpow.pop %v1300
        %v1302 = vsel %vm605, %v1295, 0.0
        %1303 = vadd.xlane.f32.xlu0 %v1302
        %v1304 = vpop.xlane.xlu0 %1303
        %v1305 = vsel %vm605, %v1297, 0.0
        %1306 = vadd.xlane.f32.xlu0 %v1305
        %v1307 = vpop.xlane.xlu0 %1306
        %v1308 = vsel %vm605, %v1299, 0.0
        %1309 = vadd.xlane.f32.xlu0 %v1308
        %v1310 = vpop.xlane.xlu0 %1309
        %v1311 = vsel %vm605, %v1301, 0.0
        %1312 = vadd.xlane.f32.xlu0 %v1311
        %v1313 = vpop.xlane.xlu0 %1312
        %v1314 = vrcp.pop %v1304
        %v1315 = vrcp.pop %v1307
        %v1316 = vrcp.pop %v1310
        %v1317 = vrcp.pop %v1313
        %v1318 = vmul.f32 %v1295, %v1314
        %v1319 = vmul.f32 %v1297, %v1315
        %v1320 = vmul.f32 %v1299, %v1316
        %v1321 = vmul.f32 %v1301, %v1317
        %v1322 = vpack.c.bf16 %v1318, %v1318
        %v1323 = vpack.c.bf16 %v1319, %v1319
        %v1324 = vpack.c.bf16 %v1320, %v1320
        %v1325 = vpack.c.bf16 %v1321, %v1321
        %1326 = vrot.lane.b32.xlu0 %v1068, 64
        %v1327 = vpop.permute.xlu0 %1326
        %v1329 = vsel %vm605, %v1322, 0
        %v1332 = vsel %vm863, %v1327, 0
        %1334 = vmatprep.subr.bf16.mxu0 0
        %1335 = vmatpush1.bf16.msra.mxu0 %v1332
        %1336 = vmatprep.subr.bf16.mxu0 0
        %1337 = vmatpush1.bf16.msra.mxu0 0
        %1338 = vmatprep.subr.bf16.mxu0 0
        %1339 = vmatpush1.bf16.msra.mxu0 0
        %1340 = vmatprep.subr.bf16.mxu0 0
        %1341 = vmatpush1.bf16.msra.mxu0 0
        %1342 = vmatprep.subr.bf16.mxu0 0
        %1343 = vmatpush1.bf16.msra.mxu0 0
        %1344 = vmatprep.subr.bf16.mxu0 0
        %1345 = vmatpush1.bf16.msra.mxu0 0
        %1346 = vmatprep.subr.bf16.mxu0 0
        %1347 = vmatpush1.bf16.msra.mxu0 0
        %1348 = vmatprep.subr.bf16.mxu0 0
        %1349 = vmatpush1.bf16.msra.mxu0 0
        %1350 = vmatprep.subr.bf16.mxu0 0
        %1351 = vmatpush1.bf16.msra.mxu0 0
        %1352 = vmatprep.subr.bf16.mxu0 0
        %1353 = vmatpush1.bf16.msra.mxu0 0
        %1354 = vmatprep.subr.bf16.mxu0 0
        %1355 = vmatpush1.bf16.msra.mxu0 0
        %1356 = vmatprep.subr.bf16.mxu0 0
        %1357 = vmatpush1.bf16.msra.mxu0 0
        %1358 = vmatprep.subr.bf16.mxu0 0
        %1359 = vmatpush1.bf16.msra.mxu0 0
        %1360 = vmatprep.subr.bf16.mxu0 0
        %1361 = vmatpush1.bf16.msra.mxu0 0
        %1362 = vmatprep.subr.bf16.mxu0 0
        %1363 = vmatpush1.bf16.msra.mxu0 0
        %1364 = vmatprep.subr.bf16.mxu0 0
        %1365 = vmatpush1.bf16.msra.mxu0 0
        %1366 = vmatprep.mubr.bf16.mxu0 0
        %1367 = vmatmul.mubr.bf16.gmra.mrb[0].mxu0 %v1329
        %v1368 = vpop.f32.mrb[0].mxu0
        %v1369 = vadd.f32 0.0, %v1368
        %v1370 = vpop.f32.mrb[0].mxu0
        %v1371 = vpop.f32.mrb[0].mxu0
        %v1372 = vpop.f32.mrb[0].mxu0
        %1373 = vdwg.mxu0
        %1374 = vrot.lane.b32.xlu0 %v1117, 64
        %v1375 = vpop.permute.xlu0 %1374
        %v1377 = vsel %vm605, %v1323, 0
        %v1380 = vsel %vm863, %v1375, 0
        %1382 = vmatprep.subr.bf16.mxu0 0
        %1383 = vmatpush1.bf16.msra.mxu0 %v1380
        %1384 = vmatprep.subr.bf16.mxu0 0
        %1385 = vmatpush1.bf16.msra.mxu0 0
        %1386 = vmatprep.subr.bf16.mxu0 0
        %1387 = vmatpush1.bf16.msra.mxu0 0
        %1388 = vmatprep.subr.bf16.mxu0 0
        %1389 = vmatpush1.bf16.msra.mxu0 0
        %1390 = vmatprep.subr.bf16.mxu0 0
        %1391 = vmatpush1.bf16.msra.mxu0 0
        %1392 = vmatprep.subr.bf16.mxu0 0
        %1393 = vmatpush1.bf16.msra.mxu0 0
        %1394 = vmatprep.subr.bf16.mxu0 0
        %1395 = vmatpush1.bf16.msra.mxu0 0
        %1396 = vmatprep.subr.bf16.mxu0 0
        %1397 = vmatpush1.bf16.msra.mxu0 0
        %1398 = vmatprep.subr.bf16.mxu0 0
        %1399 = vmatpush1.bf16.msra.mxu0 0
        %1400 = vmatprep.subr.bf16.mxu0 0
        %1401 = vmatpush1.bf16.msra.mxu0 0
        %1402 = vmatprep.subr.bf16.mxu0 0
        %1403 = vmatpush1.bf16.msra.mxu0 0
        %1404 = vmatprep.subr.bf16.mxu0 0
        %1405 = vmatpush1.bf16.msra.mxu0 0
        %1406 = vmatprep.subr.bf16.mxu0 0
        %1407 = vmatpush1.bf16.msra.mxu0 0
        %1408 = vmatprep.subr.bf16.mxu0 0
        %1409 = vmatpush1.bf16.msra.mxu0 0
        %1410 = vmatprep.subr.bf16.mxu0 0
        %1411 = vmatpush1.bf16.msra.mxu0 0
        %1412 = vmatprep.subr.bf16.mxu0 0
        %1413 = vmatpush1.bf16.msra.mxu0 0
        %1414 = vmatprep.mubr.bf16.mxu0 0
        %1415 = vmatmul.mubr.bf16.gmra.mrb[0].mxu0 %v1377
        %v1416 = vpop.f32.mrb[0].mxu0
        %v1417 = vadd.f32 0.0, %v1416
        %v1418 = vpop.f32.mrb[0].mxu0
        %v1419 = vpop.f32.mrb[0].mxu0
        %v1420 = vpop.f32.mrb[0].mxu0
        %1421 = vdwg.mxu0
        %1422 = vrot.lane.b32.xlu0 %v1166, 64
        %v1423 = vpop.permute.xlu0 %1422
        %v1425 = vsel %vm605, %v1324, 0
        %v1428 = vsel %vm863, %v1423, 0
        %1430 = vmatprep.subr.bf16.mxu0 0
        %1431 = vmatpush1.bf16.msra.mxu0 %v1428
        %1432 = vmatprep.subr.bf16.mxu0 0
        %1433 = vmatpush1.bf16.msra.mxu0 0
        %1434 = vmatprep.subr.bf16.mxu0 0
        %1435 = vmatpush1.bf16.msra.mxu0 0
        %1436 = vmatprep.subr.bf16.mxu0 0
        %1437 = vmatpush1.bf16.msra.mxu0 0
        %1438 = vmatprep.subr.bf16.mxu0 0
        %1439 = vmatpush1.bf16.msra.mxu0 0
        %1440 = vmatprep.subr.bf16.mxu0 0
        %1441 = vmatpush1.bf16.msra.mxu0 0
        %1442 = vmatprep.subr.bf16.mxu0 0
        %1443 = vmatpush1.bf16.msra.mxu0 0
        %1444 = vmatprep.subr.bf16.mxu0 0
        %1445 = vmatpush1.bf16.msra.mxu0 0
        %1446 = vmatprep.subr.bf16.mxu0 0
        %1447 = vmatpush1.bf16.msra.mxu0 0
        %1448 = vmatprep.subr.bf16.mxu0 0
        %1449 = vmatpush1.bf16.msra.mxu0 0
        %1450 = vmatprep.subr.bf16.mxu0 0
        %1451 = vmatpush1.bf16.msra.mxu0 0
        %1452 = vmatprep.subr.bf16.mxu0 0
        %1453 = vmatpush1.bf16.msra.mxu0 0
        %1454 = vmatprep.subr.bf16.mxu0 0
        %1455 = vmatpush1.bf16.msra.mxu0 0
        %1456 = vmatprep.subr.bf16.mxu0 0
        %1457 = vmatpush1.bf16.msra.mxu0 0
        %1458 = vmatprep.subr.bf16.mxu0 0
        %1459 = vmatpush1.bf16.msra.mxu0 0
        %1460 = vmatprep.subr.bf16.mxu0 0
        %1461 = vmatpush1.bf16.msra.mxu0 0
        %1462 = vmatprep.mubr.bf16.mxu0 0
        %1463 = vmatmul.mubr.bf16.gmra.mrb[0].mxu0 %v1425
        %v1464 = vpop.f32.mrb[0].mxu0
        %v1465 = vadd.f32 0.0, %v1464
        %v1466 = vpop.f32.mrb[0].mxu0
        %v1467 = vpop.f32.mrb[0].mxu0
        %v1468 = vpop.f32.mrb[0].mxu0
        %1469 = vdwg.mxu0
        %1470 = vrot.lane.b32.xlu0 %v1215, 64
        %v1471 = vpop.permute.xlu0 %1470
        %v1473 = vsel %vm605, %v1325, 0
        %v1476 = vsel %vm863, %v1471, 0
        %1478 = vmatprep.subr.bf16.mxu0 0
        %1479 = vmatpush1.bf16.msra.mxu0 %v1476
        %1480 = vmatprep.subr.bf16.mxu0 0
        %1481 = vmatpush1.bf16.msra.mxu0 0
        %1482 = vmatprep.subr.bf16.mxu0 0
        %1483 = vmatpush1.bf16.msra.mxu0 0
        %1484 = vmatprep.subr.bf16.mxu0 0
        %1485 = vmatpush1.bf16.msra.mxu0 0
        %1486 = vmatprep.subr.bf16.mxu0 0
        %1487 = vmatpush1.bf16.msra.mxu0 0
        %1488 = vmatprep.subr.bf16.mxu0 0
        %1489 = vmatpush1.bf16.msra.mxu0 0
        %1490 = vmatprep.subr.bf16.mxu0 0
        %1491 = vmatpush1.bf16.msra.mxu0 0
        %1492 = vmatprep.subr.bf16.mxu0 0
        %1493 = vmatpush1.bf16.msra.mxu0 0
        %1494 = vmatprep.subr.bf16.mxu0 0
        %1495 = vmatpush1.bf16.msra.mxu0 0
        %1496 = vmatprep.subr.bf16.mxu0 0
        %1497 = vmatpush1.bf16.msra.mxu0 0
        %1498 = vmatprep.subr.bf16.mxu0 0
        %1499 = vmatpush1.bf16.msra.mxu0 0
        %1500 = vmatprep.subr.bf16.mxu0 0
        %1501 = vmatpush1.bf16.msra.mxu0 0
        %1502 = vmatprep.subr.bf16.mxu0 0
        %1503 = vmatpush1.bf16.msra.mxu0 0
        %1504 = vmatprep.subr.bf16.mxu0 0
        %1505 = vmatpush1.bf16.msra.mxu0 0
        %1506 = vmatprep.subr.bf16.mxu0 0
        %1507 = vmatpush1.bf16.msra.mxu0 0
        %1508 = vmatprep.subr.bf16.mxu0 0
        %1509 = vmatpush1.bf16.msra.mxu0 0
        %1510 = vmatprep.mubr.bf16.mxu0 0
        %1511 = vmatmul.mubr.bf16.gmra.mrb[0].mxu0 %v1473
        %v1512 = vpop.f32.mrb[0].mxu0
        %v1513 = vadd.f32 0.0, %v1512
        %v1514 = vpop.f32.mrb[0].mxu0
        %v1515 = vpop.f32.mrb[0].mxu0
        %v1516 = vpop.f32.mrb[0].mxu0
        %1517 = vdwg.mxu0
        %1519 = vrot.lane.b32.xlu0 %v1417, 8
        %v1520 = vpop.permute.xlu0 %1519
        %1523 = vrot.lane.b32.xlu0 %v1465, 16
        %v1524 = vpop.permute.xlu0 %1523
        %1527 = vrot.lane.b32.xlu0 %v1513, 24
        %v1528 = vpop.permute.xlu0 %1527
        %v1530 = vsel %vm605, %v1369, %v1520
        %v1531 = vsel %vm1064, %v1530, %v1524
        %v1532 = vsel %vm1066, %v1531, %v1528
        %v1533 = vpack.c.bf16 %v1532, %v1067
        %v1534 = vld [vmem:[%s441] sm:$0xf]
        %v1535 = vld [vmem:[%s441 + $0x4] sm:$0xf]
        %v1536 = vld [vmem:[%s441 + $0x8] sm:$0xf]
        %v1537 = vld [vmem:[%s441 + $0xc] sm:$0xf]
        %v1538 = vlaneseq
        %v1539 = vshrl.u32 %v1538, 7
        %v1540 = vsub.s32 5, %v1539
        %v1541 = vrot.slane %v469, %v1540
        %v1546 = vunpack.c.l.b16 %v1534
        %v1547 = vunpack.c.l.b16 %v1535
        %v1548 = vunpack.c.l.b16 %v1536
        %v1549 = vunpack.c.l.b16 %v1537
        %v1550 = vpack.c.b16 %v1547, %v1546
        %v1551 = vpack.c.b16 %v1549, %v1548
        %v1555 = vsel %vm476, %v1533, 0
        %1557 = vmatprep.subr.bf16.mxu0 0
        %1558 = vmatpush1.bf16.msra.mxu0 %v1550
        %1559 = vmatprep.subr.bf16.mxu0 0
        %1560 = vmatpush1.bf16.msra.mxu0 %v1551
        %1561 = vmatprep.subr.bf16.mxu0 0
        %1562 = vmatpush1.bf16.msra.mxu0 0
        %1563 = vmatprep.subr.bf16.mxu0 0
        %1564 = vmatpush1.bf16.msra.mxu0 0
        %1565 = vmatprep.subr.bf16.mxu0 0
        %1566 = vmatpush1.bf16.msra.mxu0 0
        %1567 = vmatprep.subr.bf16.mxu0 0
        %1568 = vmatpush1.bf16.msra.mxu0 0
        %1569 = vmatprep.subr.bf16.mxu0 0
        %1570 = vmatpush1.bf16.msra.mxu0 0
        %1571 = vmatprep.subr.bf16.mxu0 0
        %1572 = vmatpush1.bf16.msra.mxu0 0
        %1573 = vmatprep.subr.bf16.mxu0 0
        %1574 = vmatpush1.bf16.msra.mxu0 0
        %1575 = vmatprep.subr.bf16.mxu0 0
        %1576 = vmatpush1.bf16.msra.mxu0 0
        %1577 = vmatprep.subr.bf16.mxu0 0
        %1578 = vmatpush1.bf16.msra.mxu0 0
        %1579 = vmatprep.subr.bf16.mxu0 0
        %1580 = vmatpush1.bf16.msra.mxu0 0
        %1581 = vmatprep.subr.bf16.mxu0 0
        %1582 = vmatpush1.bf16.msra.mxu0 0
        %1583 = vmatprep.subr.bf16.mxu0 0
        %1584 = vmatpush1.bf16.msra.mxu0 0
        %1585 = vmatprep.subr.bf16.mxu0 0
        %1586 = vmatpush1.bf16.msra.mxu0 0
        %1587 = vmatprep.subr.bf16.mxu0 0
        %1588 = vmatpush1.bf16.msra.mxu0 0
        %1589 = vmatprep.mubr.bf16.mxu0 0
        %1590 = vmatmul.mubr.bf16.gmra.mrb[0].mxu0 %v1555
        %v1591 = vpop.f32.mrb[0].mxu0
        %v1592 = vadd.f32 %v1541, %v1591
        %v1593 = vpop.f32.mrb[0].mxu0
        %v1594 = vpop.f32.mrb[0].mxu0
        %v1595 = vadd.f32 %v1541, %v1594
        %v1596 = vpop.f32.mrb[0].mxu0
        %1597 = vdwg.mxu0
        %v1598 = vadd.f32 %v467, %v1592
        %v1599 = vadd.f32 %v468, %v1595
        %v1600 = vsel %vm476, %v1598, 0.0
        %1601 = vadd.xlane.f32.xlu0 %v1600
        %v1602 = vpop.xlane.xlu0 %1601
        %v1603 = vsel %vm476, %v1599, 0.0
        %1604 = vadd.xlane.f32.xlu0 %v1603
        %v1605 = vpop.xlane.xlu0 %1604
        %v1606 = vmul.f32 %v1602, %v483
        %v1607 = vmul.f32 %v1605, %v483
        %v1608 = vsub.f32 %v1598, %v1606
        %v1609 = vsub.f32 %v1599, %v1607
        %v1610 = vmul.f32 %v1608, %v1608
        %v1611 = vmul.f32 %v1609, %v1609
        %v1612 = vsel %vm476, %v1610, 0.0
        %1613 = vadd.xlane.f32.xlu0 %v1612
        %v1614 = vpop.xlane.xlu0 %1613
        %v1615 = vsel %vm476, %v1611, 0.0
        %1616 = vadd.xlane.f32.xlu0 %v1615
        %v1617 = vpop.xlane.xlu0 %1616
        %v1618 = vmul.f32 %v1614, 0.032258064
        %v1619 = vmul.f32 %v1617, 0.032258064
        %v1620 = vlaneseq
        %v1621 = vshrl.u32 %v1620, 7
        %v1622 = vsub.s32 2, %v1621
        %v1623 = vrot.slane %v469, %v1622
        %v1624 = vmul.f32 %v1623, %v1608
        %v1625 = vmul.f32 %v1623, %v1609
        %v1626 = vrsqrt.pop %v1618
        %v1627 = vmul.f32 %v1618, %v1626
        %vm1628 = vcmp.eq.f32.partialorder %v1618, inf
        %v1629 = vsel %vm1628, %v1618, %v1627
        %vm1630 = vcmp.eq.f32.partialorder %v1618, 0.0
        %v1631 = vand.u32 %v1618, 2147483648
        %v1632 = vsel %vm1630, %v1631, %v1629
        %v1633 = vrsqrt.pop %v1619
        %v1634 = vmul.f32 %v1619, %v1633
        %vm1635 = vcmp.eq.f32.partialorder %v1619, inf
        %v1636 = vsel %vm1635, %v1619, %v1634
        %vm1637 = vcmp.eq.f32.partialorder %v1619, 0.0
        %v1638 = vand.u32 %v1619, 2147483648
        %v1639 = vsel %vm1637, %v1638, %v1636
        %v1640 = vadd.f32 %v1632, 1e-06
        %v1641 = vadd.f32 %v1639, 1e-06
        %v1642 = vrcp.pop %v1640
        %v1643 = vmul.f32 %v1624, %v1642
        %v1644 = vrcp.pop %v1641
        %v1645 = vmul.f32 %v1625, %v1644
        %v1646 = vlaneseq
        %v1647 = vshrl.u32 %v1646, 7
        %v1648 = vsub.s32 3, %v1647
        %v1649 = vrot.slane %v469, %v1648
        %v1650 = vadd.f32 %v1643, %v1649
        %v1651 = vadd.f32 %v1645, %v1649
        %v1652 = vpack.c.bf16 %v1651, %v1650
        %v1653 = vld [vmem:[%s446] sm:$0xf]
        %v1654 = vld [vmem:[%s446 + $0x4] sm:$0xf]
        %v1655 = vld [vmem:[%s446 + $0x8] sm:$0xf]
        %v1656 = vld [vmem:[%s446 + $0xc] sm:$0xf]
        %v1657 = vlaneseq
        %v1658 = vshrl.u32 %v1657, 7
        %v1659 = vsub.s32 6, %v1658
        %v1660 = vrot.slane %v469, %v1659
        %v1665 = vunpack.c.l.b16 %v1653
        %v1666 = vunpack.c.l.b16 %v1654
        %v1667 = vunpack.c.l.b16 %v1655
        %v1668 = vunpack.c.l.b16 %v1656
        %v1669 = vpack.c.b16 %v1666, %v1665
        %v1670 = vpack.c.b16 %v1668, %v1667
        %v1674 = vsel %vm476, %v1652, 0
        %1676 = vmatprep.subr.bf16.mxu0 0
        %1677 = vmatpush1.bf16.msra.mxu0 %v1669
        %1678 = vmatprep.subr.bf16.mxu0 0
        %1679 = vmatpush1.bf16.msra.mxu0 %v1670
        %1680 = vmatprep.subr.bf16.mxu0 0
        %1681 = vmatpush1.bf16.msra.mxu0 0
        %1682 = vmatprep.subr.bf16.mxu0 0
        %1683 = vmatpush1.bf16.msra.mxu0 0
        %1684 = vmatprep.subr.bf16.mxu0 0
        %1685 = vmatpush1.bf16.msra.mxu0 0
        %1686 = vmatprep.subr.bf16.mxu0 0
        %1687 = vmatpush1.bf16.msra.mxu0 0
        %1688 = vmatprep.subr.bf16.mxu0 0
        %1689 = vmatpush1.bf16.msra.mxu0 0
        %1690 = vmatprep.subr.bf16.mxu0 0
        %1691 = vmatpush1.bf16.msra.mxu0 0
        %1692 = vmatprep.subr.bf16.mxu0 0
        %1693 = vmatpush1.bf16.msra.mxu0 0
        %1694 = vmatprep.subr.bf16.mxu0 0
        %1695 = vmatpush1.bf16.msra.mxu0 0
        %1696 = vmatprep.subr.bf16.mxu0 0
        %1697 = vmatpush1.bf16.msra.mxu0 0
        %1698 = vmatprep.subr.bf16.mxu0 0
        %1699 = vmatpush1.bf16.msra.mxu0 0
        %1700 = vmatprep.subr.bf16.mxu0 0
        %1701 = vmatpush1.bf16.msra.mxu0 0
        %1702 = vmatprep.subr.bf16.mxu0 0
        %1703 = vmatpush1.bf16.msra.mxu0 0
        %1704 = vmatprep.subr.bf16.mxu0 0
        %1705 = vmatpush1.bf16.msra.mxu0 0
        %1706 = vmatprep.subr.bf16.mxu0 0
        %1707 = vmatpush1.bf16.msra.mxu0 0
        %1708 = vmatprep.mubr.bf16.mxu0 0
        %1709 = vmatmul.mubr.bf16.gmra.mrb[0].mxu0 %v1674
        %v1710 = vpop.f32.mrb[0].mxu0
        %v1711 = vadd.f32 %v1660, %v1710
        %v1712 = vpop.f32.mrb[0].mxu0
        %v1713 = vpop.f32.mrb[0].mxu0
        %v1714 = vadd.f32 %v1660, %v1713
        %v1715 = vpop.f32.mrb[0].mxu0
        %1716 = vdwg.mxu0
        %v1717 = vmax.f32 %v1711, 0.0
        %v1718 = vmax.f32 %v1714, 0.0
        %v1719 = vpack.c.bf16 %v1718, %v1717
        %v1720 = vld [vmem:[%s451] sm:$0xf]
        %v1721 = vld [vmem:[%s451 + $0x4] sm:$0xf]
        %v1722 = vld [vmem:[%s451 + $0x8] sm:$0xf]
        %v1723 = vld [vmem:[%s451 + $0xc] sm:$0xf]
        %v1724 = vld [vmem:[%s451 + $0x10] sm:$0xf]
        %v1725 = vld [vmem:[%s451 + $0x14] sm:$0xf]
        %v1726 = vld [vmem:[%s451 + $0x18] sm:$0xf]
        %v1727 = vld [vmem:[%s451 + $0x1c] sm:$0xf]
        %v1728 = vlaneseq
        %v1729 = vshrl.u32 %v1728, 7
        %v1730 = vsub.s32 7, %v1729
        %v1731 = vrot.slane %v469, %v1730
        %v1740 = vunpack.c.l.b16 %v1720
        %v1741 = vunpack.c.l.b16 %v1721
        %v1742 = vunpack.c.l.b16 %v1722
        %v1743 = vunpack.c.l.b16 %v1723
        %v1744 = vunpack.c.l.b16 %v1724
        %v1745 = vunpack.c.l.b16 %v1725
        %v1746 = vunpack.c.l.b16 %v1726
        %v1747 = vunpack.c.l.b16 %v1727
        %v1748 = vpack.c.b16 %v1741, %v1740
        %v1749 = vpack.c.b16 %v1743, %v1742
        %v1750 = vpack.c.b16 %v1745, %v1744
        %v1751 = vpack.c.b16 %v1747, %v1746
        %vm1756 = vcmask 523264
        %v1758 = vsel %vm1756, %v1719, 0
        %1760 = vmatprep.subr.bf16.mxu0 0
        %1761 = vmatpush1.bf16.msra.mxu0 %v1748
        %1762 = vmatprep.subr.bf16.mxu0 0
        %1763 = vmatpush1.bf16.msra.mxu0 %v1749
        %1764 = vmatprep.subr.bf16.mxu0 0
        %1765 = vmatpush1.bf16.msra.mxu0 %v1750
        %1766 = vmatprep.subr.bf16.mxu0 0
        %1767 = vmatpush1.bf16.msra.mxu0 %v1751
        %1768 = vmatprep.subr.bf16.mxu0 0
        %1769 = vmatpush1.bf16.msra.mxu0 0
        %1770 = vmatprep.subr.bf16.mxu0 0
        %1771 = vmatpush1.bf16.msra.mxu0 0
        %1772 = vmatprep.subr.bf16.mxu0 0
        %1773 = vmatpush1.bf16.msra.mxu0 0
        %1774 = vmatprep.subr.bf16.mxu0 0
        %1775 = vmatpush1.bf16.msra.mxu0 0
        %1776 = vmatprep.subr.bf16.mxu0 0
        %1777 = vmatpush1.bf16.msra.mxu0 0
        %1778 = vmatprep.subr.bf16.mxu0 0
        %1779 = vmatpush1.bf16.msra.mxu0 0
        %1780 = vmatprep.subr.bf16.mxu0 0
        %1781 = vmatpush1.bf16.msra.mxu0 0
        %1782 = vmatprep.subr.bf16.mxu0 0
        %1783 = vmatpush1.bf16.msra.mxu0 0
        %1784 = vmatprep.subr.bf16.mxu0 0
        %1785 = vmatpush1.bf16.msra.mxu0 0
        %1786 = vmatprep.subr.bf16.mxu0 0
        %1787 = vmatpush1.bf16.msra.mxu0 0
        %1788 = vmatprep.subr.bf16.mxu0 0
        %1789 = vmatpush1.bf16.msra.mxu0 0
        %1790 = vmatprep.subr.bf16.mxu0 0
        %1791 = vmatpush1.bf16.msra.mxu0 0
        %1792 = vmatprep.mubr.bf16.mxu0 0
        %1793 = vmatmul.mubr.bf16.gmra.mrb[0].mxu0 %v1758
        %v1794 = vpop.f32.mrb[0].mxu0
        %v1795 = vadd.f32 %v1731, %v1794
        %v1796 = vpop.f32.mrb[0].mxu0
        %v1797 = vpop.f32.mrb[0].mxu0
        %v1798 = vadd.f32 %v1731, %v1797
        %v1799 = vpop.f32.mrb[0].mxu0
        %1800 = vdwg.mxu0
        %v1801 = vadd.f32 %v1598, %v1795
        %v1802 = vadd.f32 %v1599, %v1798
        %1803 = vst.msk [vmem:[#allocation2] sm:$0xff] %vm476, %v1801
        %1804 = vst.msk [vmem:[#allocation2 + $0x8] sm:$0xff] %vm476, %v1802
        %p1805 = scmp.eq.s32.totalorder %s27, 1
        // Predicated region
        $region65: #{tpu_custom_call.1} parent=55 // pred_check
          %p1806 = pneg %p1805
        $region66: #{tpu_custom_call.1} parent=55 // pred_check_branch
          %1808 = sbr.rel (%p1806) target = $region68
        $region67: #{tpu_custom_call.1} parent=55 // pred_region
          %v1809 = vld [vmem:[%s7] sm:$0x1]
          %v1810 = vld [vmem:[%s8] sm:$0x1]
          %v1811 = vsel %vm476, %v1801, 0.0
          %1812 = vadd.xlane.f32.xlu0 %v1811
          %v1813 = vpop.xlane.xlu0 %1812
          %v1814 = vsel %vm476, %v1802, 0.0
          %1815 = vadd.xlane.f32.xlu0 %v1814
          %v1816 = vpop.xlane.xlu0 %1815
          %v1817 = vmul.f32 %v1813, %v483
          %v1818 = vmul.f32 %v1816, %v483
          %v1819 = vsub.f32 %v1801, %v1817
          %v1820 = vsub.f32 %v1802, %v1818
          %v1821 = vmul.f32 %v1819, %v1819
          %v1822 = vmul.f32 %v1820, %v1820
          %v1823 = vsel %vm476, %v1821, 0.0
          %1824 = vadd.xlane.f32.xlu0 %v1823
          %v1825 = vpop.xlane.xlu0 %1824
          %v1826 = vsel %vm476, %v1822, 0.0
          %1827 = vadd.xlane.f32.xlu0 %v1826
          %v1828 = vpop.xlane.xlu0 %1827
          %v1829 = vmul.f32 %v1825, 0.032258064
          %v1830 = vmul.f32 %v1828, 0.032258064
          %v1832 = vlaneseq
          %v1833 = vshrl.u32 %v1832, 7
          %v1834 = vsub.s32 0, %v1833
          %v1835 = vrot.slane %v1809, %v1834
          %v1837 = vmul.f32 %v1835, %v1819
          %v1838 = vmul.f32 %v1835, %v1820
          %v1839 = vrsqrt.pop %v1829
          %v1840 = vmul.f32 %v1829, %v1839
          %vm1841 = vcmp.eq.f32.partialorder %v1829, inf
          %v1842 = vsel %vm1841, %v1829, %v1840
          %vm1843 = vcmp.eq.f32.partialorder %v1829, 0.0
          %v1844 = vand.u32 %v1829, 2147483648
          %v1845 = vsel %vm1843, %v1844, %v1842
          %v1846 = vrsqrt.pop %v1830
          %v1847 = vmul.f32 %v1830, %v1846
          %vm1848 = vcmp.eq.f32.partialorder %v1830, inf
          %v1849 = vsel %vm1848, %v1830, %v1847
          %vm1850 = vcmp.eq.f32.partialorder %v1830, 0.0
          %v1851 = vand.u32 %v1830, 2147483648
          %v1852 = vsel %vm1850, %v1851, %v1849
          %v1853 = vadd.f32 %v1845, 1e-06
          %v1854 = vadd.f32 %v1852, 1e-06
          %v1855 = vrcp.pop %v1853
          %v1856 = vmul.f32 %v1837, %v1855
          %v1857 = vrcp.pop %v1854
          %v1858 = vmul.f32 %v1838, %v1857
          %v1860 = vlaneseq
          %v1861 = vshrl.u32 %v1860, 7
          %v1862 = vsub.s32 0, %v1861
          %v1863 = vrot.slane %v1810, %v1862
          %v1865 = vadd.f32 %v1856, %v1863
          %v1866 = vadd.f32 %v1858, %v1863
          %1867 = vst.msk [vmem:[#allocation6] sm:$0xff] %vm476, %v1865
          %1868 = vst.msk [vmem:[#allocation6 + $0x8] sm:$0xff] %vm476, %v1866
        $region68: #{tpu_custom_call.1} parent=55 // pred_fallthru
          _
        // Predicated region
        $region69: #{tpu_custom_call.1} parent=55 // pred_check
          %p1869 = pneg %p276
        $region70: #{tpu_custom_call.1} parent=55 // pred_check_branch
          %1871 = sbr.rel (%p1869) target = $region72
        $region71: #{tpu_custom_call.1} parent=55 // pred_region
          %s1872 = smul.u32 2, %s26
          %s1874 = ssub.s32 256, 256
          %1875 = vsyncadd [#allocation5], %s1874
          %s1876 = smul.addr %s1872, 128
          %s1877 = scalar_lea.hbm %s9, %s1876
          %s1878 = sshll.u32 [#allocation6], 4
          %s1879 = int_to_ptr.vmem [resolvable:$true] %s1878
          %1884 = dma.vmem_to_hbm [thread:$0]  %s1879, 256, %s1877, [#allocation5], 128, 128, 8
        $region72: #{tpu_custom_call.1} parent=55 // pred_fallthru
          _
        // Predicated region
        $region73: #{tpu_custom_call.1} parent=55 // pred_check
          %p1885 = pneg %p276
        $region74: #{tpu_custom_call.1} parent=55 // pred_check_branch
          %1887 = sbr.rel (%p1885) target = $region76
        $region75: #{tpu_custom_call.1} parent=55 // pred_region
          %1888 = dma.done [#allocation5], 256
        $region76: #{tpu_custom_call.1} parent=55 // pred_fallthru
          _
      $region56: #{tpu_custom_call.1} parent=5 // pred_fallthru
        _
      %p1889 = scmp.le.s32.totalorder 2, %s17
      // Predicated region
      $region77: #{tpu_custom_call.1} parent=5 // pred_check
        %p1890 = pneg %p1889
      $region78: #{tpu_custom_call.1} parent=5 // pred_check_branch
        %1892 = sbr.rel (%p1890) target = $region80
      $region79: #{tpu_custom_call.1} parent=5 // pred_region
        %s1893 = ssub.s32 %s17, 2
      $region80: #{tpu_custom_call.1} parent=5 // pred_fallthru
        _
    $region6: #{tpu_custom_call.1} parent=1 // loop_footer
      %s21 = sadd.s32 1, %s17
    $region7: #{tpu_custom_call.1} parent=1 // loop_footer_branch
      %16 = sbr.rel target = $region3
    $region8: #{tpu_custom_call.1} parent=1 // loop_exit
      _
    %1894 = vsyncpa [#allocation4], 1
    %s1895 = scalar_lea.sflag [#allocation4], 1
    %1896 = vsyncpa %s1895, 1
    %1897 = vsyncpa [#allocation5], 1
    %s1898 = scalar_lea.sflag [#allocation5], 1
    %1899 = vsyncpa %s1898, 1

</llo_original>
